<compile_context>
chip_gen: v5e
topology: v5e:2x2
jax: 0.10.0
libtpu: 0.0.40
codegen_flags: <defaults>
</compile_context>

<pallas_src>
import functools

import jax
import jax.numpy as jnp
from jax import lax
from jax.experimental import pallas as pl
from jax.experimental.pallas import tpu as pltpu


# ----------------------------------------------------------------------------
# helpers
# ----------------------------------------------------------------------------
def _pick_tile(L, max_tile):
    """Largest multiple-of-128 divisor of L that is <= max_tile (else L itself)."""
    if L % 128 != 0:
        return L
    tl = 128
    while tl * 2 <= max_tile and L % (tl * 2) == 0:
        tl *= 2
    return tl


def _vmem_limit_bytes(*buf_bytes):
    # double-buffered pipeline tiles + headroom, clamped to a v7x-safe 32 MiB.
    need = 2 * int(sum(buf_bytes)) + (4 << 20)
    return int(min(32 << 20, max(need, 16 << 20)))


# ----------------------------------------------------------------------------
# Kernel A: projection accumulation + GCN (once per batch, at last L-tile)
# ----------------------------------------------------------------------------
def glore_proj_gcn_kernel(x_ref, ws_ref, bs_ref, wp_ref, bp_ref,
                          wg1_ref, bg1_ref, wg2_ref, g_ref, acc_ref):
    lt = pl.program_id(1)

    @pl.when(lt == 0)
    def _():
        acc_ref[...] = jnp.zeros_like(acc_ref)

    x = x_ref[0]                                                    # (C, TL)
    # conv_state / conv_proj: contract the channel axis, L stays on lanes.
    xs = lax.dot_general(ws_ref[...], x, (((1,), (0,)), ((), ())),
                         preferred_element_type=jnp.float32) + bs_ref[...]   # (S, TL)
    xp = lax.dot_general(wp_ref[...], x, (((1,), (0,)), ((), ())),
                         preferred_element_type=jnp.float32) + bp_ref[...]   # (N, TL)
    # a += xs @ xp^T  (contract the L-tile axis directly; no explicit transpose)
    acc_ref[...] += lax.dot_general(xs, xp, (((1,), (1,)), ((), ())),
                                    preferred_element_type=jnp.float32)      # (S, N)

    @pl.when(lt == pl.num_programs(1) - 1)
    def _():
        a = acc_ref[...]
        # GCN conv1 over the node axis: h = a @ w_gcn1^T + b_gcn1
        h = lax.dot_general(a, wg1_ref[...], (((1,), (1,)), ((), ())),
                            preferred_element_type=jnp.float32) + bg1_ref[...]
        h = jnp.maximum(h + a, 0.0)
        # GCN conv2 over the state axis: g = w_gcn2 @ h
        g = jnp.dot(wg2_ref[...], h, preferred_element_type=jnp.float32)
        g_ref[0] = g.astype(g_ref.dtype)


def glore_proj_gcn(x_flat, w_state, b_state, w_proj, b_proj,
                   w_gcn1, b_gcn1, w_gcn2, tl):
    n, C, L = x_flat.shape
    S = w_state.shape[0]
    N = w_proj.shape[0]
    const = lambda b, l: (0, 0)
    flops = int(n * L * 2 * (C * S + C * N + S * N)
                + n * (2 * S * N * N + 2 * S * S * N))
    bytes_accessed = int(4 * (n * C * L + n * S * N + C * (S + N) + N * N + S * S))
    return pl.pallas_call(
        glore_proj_gcn_kernel,
        out_shape=jax.ShapeDtypeStruct((n, S, N), jnp.float32),
        grid=(n, L // tl),
        in_specs=[
            pl.BlockSpec((1, C, tl), lambda b, l: (b, 0, l)),   # x tile
            pl.BlockSpec((S, C), const),                        # w_state
            pl.BlockSpec((S, 1), const),                        # b_state
            pl.BlockSpec((N, C), const),                        # w_proj
            pl.BlockSpec((N, 1), const),                        # b_proj
            pl.BlockSpec((N, N), const),                        # w_gcn1
            pl.BlockSpec((1, N), const),                        # b_gcn1
            pl.BlockSpec((S, S), const),                        # w_gcn2
        ],
        out_specs=pl.BlockSpec((1, S, N), lambda b, l: (b, 0, 0)),
        scratch_shapes=[pltpu.VMEM((S, N), jnp.float32)],
        compiler_params=pltpu.CompilerParams(
            dimension_semantics=("parallel", "arbitrary"),
            vmem_limit_bytes=_vmem_limit_bytes(4 * C * tl, 4 * (S + N) * tl),
        ),
        cost_estimate=pl.CostEstimate(flops=flops, transcendentals=0,
                                      bytes_accessed=bytes_accessed),
    )(x_flat, w_state, b_state, w_proj, b_proj, w_gcn1, b_gcn1, w_gcn2)


# ----------------------------------------------------------------------------
# Kernel B: reverse projection + conv_extend + per-batch BN partial stats
# ----------------------------------------------------------------------------
def glore_backproj_kernel(x_ref, g_ref, wp_ref, bp_ref, wext_ref,
                          y_ref, sum_ref, sumsq_ref):
    lt = pl.program_id(1)

    @pl.when(lt == 0)
    def _():
        sum_ref[...] = jnp.zeros_like(sum_ref)
        sumsq_ref[...] = jnp.zeros_like(sumsq_ref)

    x = x_ref[0]                                                    # (C, TL)
    g = g_ref[0]                                                    # (S, N)
    # recompute conv_proj for this tile (cheaper than staging xp via HBM)
    xp = lax.dot_general(wp_ref[...], x, (((1,), (0,)), ((), ())),
                         preferred_element_type=jnp.float32) + bp_ref[...]   # (N, TL)
    xsn = jnp.dot(g, xp, preferred_element_type=jnp.float32)                 # (S, TL)
    y = jnp.dot(wext_ref[...], xsn, preferred_element_type=jnp.float32)      # (C, TL)
    y_ref[0] = y.astype(y_ref.dtype)

    # per-batch partial BatchNorm statistics (finalized by a tiny JAX reduction)
    sum_ref[0] += jnp.sum(y, axis=1, keepdims=True)                          # (C, 1)
    sumsq_ref[0] += jnp.sum(y * y, axis=1, keepdims=True)


def glore_backproj(x_flat, g, w_proj, b_proj, w_ext, tl):
    n, C, L = x_flat.shape
    S, N = g.shape[1], g.shape[2]
    const = lambda b, l: (0, 0)
    flops = int(n * L * 2 * (C * N + N * S + S * C) + 3 * n * C * L)
    bytes_accessed = int(4 * (2 * n * C * L + n * S * N + C * N + N + C * S))
    out_shape = (jax.ShapeDtypeStruct((n, C, L), jnp.float32),
                 jax.ShapeDtypeStruct((n, C, 1), jnp.float32),
                 jax.ShapeDtypeStruct((n, C, 1), jnp.float32))
    return pl.pallas_call(
        glore_backproj_kernel,
        out_shape=out_shape,
        grid=(n, L // tl),
        in_specs=[
            pl.BlockSpec((1, C, tl), lambda b, l: (b, 0, l)),   # x tile
            pl.BlockSpec((1, S, N), lambda b, l: (b, 0, 0)),    # g (per batch)
            pl.BlockSpec((N, C), const),                        # w_proj
            pl.BlockSpec((N, 1), const),                        # b_proj
            pl.BlockSpec((C, S), const),                        # w_ext
        ],
        out_specs=(
            pl.BlockSpec((1, C, tl), lambda b, l: (b, 0, l)),   # y tile
            pl.BlockSpec((1, C, 1), lambda b, l: (b, 0, 0)),    # per-batch sum
            pl.BlockSpec((1, C, 1), lambda b, l: (b, 0, 0)),    # per-batch sumsq
        ),
        compiler_params=pltpu.CompilerParams(
            dimension_semantics=("parallel", "arbitrary"),
            vmem_limit_bytes=_vmem_limit_bytes(4 * 2 * C * tl, 4 * (S + N) * tl),
        ),
        cost_estimate=pl.CostEstimate(flops=flops, transcendentals=0,
                                      bytes_accessed=bytes_accessed),
    )(x_flat, g, w_proj, b_proj, w_ext)


# ----------------------------------------------------------------------------
# Kernel C: folded BatchNorm (scale/shift) + residual add, in place over y
# ----------------------------------------------------------------------------
def bn_residual_kernel(x_ref, y_ref, scale_ref, shift_ref, out_ref):
    out_ref[...] = x_ref[...] + y_ref[...] * scale_ref[...] + shift_ref[...]


def bn_residual(x_flat, y_flat, scale, shift, tl):
    n, C, L = x_flat.shape
    flops = int(3 * n * C * L)
    bytes_accessed = int(4 * 3 * n * C * L)
    return pl.pallas_call(
        bn_residual_kernel,
        out_shape=jax.ShapeDtypeStruct((n, C, L), jnp.float32),
        grid=(n, L // tl),
        in_specs=[
            pl.BlockSpec((1, C, tl), lambda b, l: (b, 0, l)),
            pl.BlockSpec((1, C, tl), lambda b, l: (b, 0, l)),
            pl.BlockSpec((1, C, 1), lambda b, l: (0, 0, 0)),
            pl.BlockSpec((1, C, 1), lambda b, l: (0, 0, 0)),
        ],
        out_specs=pl.BlockSpec((1, C, tl), lambda b, l: (b, 0, l)),
        input_output_aliases={1: 0},     # reuse the y buffer for the output
        compiler_params=pltpu.CompilerParams(
            dimension_semantics=("parallel", "parallel"),
            vmem_limit_bytes=_vmem_limit_bytes(4 * 3 * C * tl),
        ),
        cost_estimate=pl.CostEstimate(flops=flops, transcendentals=0,
                                      bytes_accessed=bytes_accessed),
    )(x_flat, y_flat, scale, shift)


# ----------------------------------------------------------------------------
# Wrapper: full GloRe_Unit forward (normalize=False, training-mode BatchNorm,
#          eps=1e-4 as set explicitly by the module)
# ----------------------------------------------------------------------------
def glore_unit_forward(x, params, eps=1e-4, max_tile=512):
    n, c, d, h, w = x.shape
    L = d * h * w
    x_flat = x.reshape(n, c, L)          # NCDHW -> (n, C, L): free reshape, L on lanes
    tl = _pick_tile(L, max_tile)

    g = glore_proj_gcn(
        x_flat,
        params["w_state"], params["b_state"].reshape(-1, 1),
        params["w_proj"], params["b_proj"].reshape(-1, 1),
        params["w_gcn1"], params["b_gcn1"].reshape(1, -1),
        params["w_gcn2"], tl)

    y_flat, ysum, ysumsq = glore_backproj(
        x_flat, g,
        params["w_proj"], params["b_proj"].reshape(-1, 1),
        params["w_ext"], tl)

    # BatchNorm3d training-mode batch statistics (biased variance), folded to
    # a per-channel scale/shift applied in kernel C.
    count = n * L
    mean = jnp.sum(ysum[:, :, 0], axis=0) / count
    var = jnp.sum(ysumsq[:, :, 0], axis=0) / count - mean * mean
    # TODO(synk): single-pass sum/sumsq variance can lose precision for very
    # large activation magnitudes; switch to a two-pass mean/var if needed.
    inv_std = lax.rsqrt(var + eps)
    scale = (params["gamma"] * inv_std).reshape(1, c, 1)
    shift = (params["beta"] - mean * params["gamma"] * inv_std).reshape(1, c, 1)

    out_flat = bn_residual(x_flat, y_flat, scale, shift, tl)
    return out_flat.reshape(n, c, d, h, w)


# ----------------------------------------------------------------------------
# Pure-JAX reference (mirrors the PyTorch forward exactly) for validation
# ----------------------------------------------------------------------------
def glore_unit_reference(x, params, eps=1e-4):
    n, c, d, h, w = x.shape
    L = d * h * w
    xf = x.reshape(n, c, L)
    xs = jnp.einsum("oc,ncl->nol", params["w_state"], xf) + params["b_state"][None, :, None]
    xp = jnp.einsum("oc,ncl->nol", params["w_proj"], xf) + params["b_proj"][None, :, None]
    a = jnp.einsum("nsl,ntl->nst", xs, xp)                           # (n, S, N)
    hh = jnp.einsum("ij,nkj->nki", params["w_gcn1"], a) + params["b_gcn1"][None, None, :]
    hh = jnp.maximum(hh + a, 0.0)
    g = jnp.einsum("ij,njk->nik", params["w_gcn2"], hh)              # (n, S, N)
    xsn = jnp.einsum("nst,ntl->nsl", g, xp)                          # (n, S, L)
    y = jnp.einsum("os,nsl->nol", params["w_ext"], xsn)              # (n, C, L)
    mean = jnp.mean(y, axis=(0, 2))
    var = jnp.var(y, axis=(0, 2))
    y_bn = (params["gamma"][None, :, None] * (y - mean[None, :, None])
            / jnp.sqrt(var + eps)[None, :, None] + params["beta"][None, :, None])
    return x + y_bn.reshape(n, c, d, h, w)


if __name__ == "__main__":
    # Module config: num_in=4, num_mid=4 -> num_s=8, num_n=4
    num_in, num_mid = 4, 4
    num_s, num_n = 2 * num_mid, num_mid
    n, d, h, w = 2, 4, 8, 8                     # L = 256 -> two 128-wide L-tiles

    key = jax.random.PRNGKey(0)
    ks = jax.random.split(key, 9)

    def init(k, shape, scale=0.2):
        return (scale * jax.random.normal(k, shape)).astype(jnp.float32)

    params = {
        "w_state": init(ks[0], (num_s, num_in)),     # conv_state weight (1x1x1)
        "b_state": init(ks[1], (num_s,)),
        "w_proj":  init(ks[2], (num_n, num_in)),     # conv_proj weight (1x1x1)
        "b_proj":  init(ks[3], (num_n,)),
        "w_gcn1":  init(ks[4], (num_n, num_n)),      # GCN conv1 (Conv1d k=1)
        "b_gcn1":  init(ks[5], (num_n,)),
        "w_gcn2":  init(ks[6], (num_s, num_s)),      # GCN conv2 (Conv1d k=1, no bias)
        "w_ext":   init(ks[7], (num_in, num_s)),     # conv_extend (no bias)
        "gamma":   jnp.ones((num_in,), jnp.float32), # BatchNorm3d defaults
        "beta":    jnp.zeros((num_in,), jnp.float32),
    }

    x = init(ks[8], (n, num_in, d, h, w), scale=1.0)

    fwd = jax.jit(functools.partial(glore_unit_forward, max_tile=128))
    out = jax.block_until_ready(fwd(x, params))

    ref = glore_unit_reference(x, params)
    assert out.shape == (n, num_in, d, h, w)
    max_err = float(jnp.max(jnp.abs(out - ref)))
    assert jnp.allclose(out, ref, atol=5e-4, rtol=5e-4), max_err

    print("KERNEL_OK")
</pallas_src>

<mosaic_0001>
module attributes {stable_mosaic.version = 11 : i64} {
  func.func @glore_proj_gcn_kernel(%arg0: i32, %arg1: i32, %arg2: memref<1x4x128xf32, #tpu.memory_space<vmem>>, %arg3: memref<8x4xf32, #tpu.memory_space<vmem>>, %arg4: memref<8x1xf32, #tpu.memory_space<vmem>>, %arg5: memref<4x4xf32, #tpu.memory_space<vmem>>, %arg6: memref<4x1xf32, #tpu.memory_space<vmem>>, %arg7: memref<4x4xf32, #tpu.memory_space<vmem>>, %arg8: memref<1x4xf32, #tpu.memory_space<vmem>>, %arg9: memref<8x8xf32, #tpu.memory_space<vmem>>, %arg10: memref<1x8x4xf32, #tpu.memory_space<vmem>>, %arg11: memref<8x4xf32, #tpu.memory_space<vmem>>) attributes {dimension_semantics = [#tpu.dimension_semantics<parallel>, #tpu.dimension_semantics<arbitrary>], iteration_bounds = array<i64: 2, 2>, scalar_prefetch = 0 : i64, scratch_operands = 1 : i64, tpu.core_type = #tpu.core_type<tc>, window_params = [{transform_indices = @transform_0, window_bounds = array<i64: 1, 4, 128>}, {pipeline_mode = #tpu.pipeline_mode<synchronous>, transform_indices = @transform_1, window_bounds = array<i64: 8, 4>}, {pipeline_mode = #tpu.pipeline_mode<synchronous>, transform_indices = @transform_2, window_bounds = array<i64: 8, 1>}, {pipeline_mode = #tpu.pipeline_mode<synchronous>, transform_indices = @transform_3, window_bounds = array<i64: 4, 4>}, {pipeline_mode = #tpu.pipeline_mode<synchronous>, transform_indices = @transform_4, window_bounds = array<i64: 4, 1>}, {pipeline_mode = #tpu.pipeline_mode<synchronous>, transform_indices = @transform_5, window_bounds = array<i64: 4, 4>}, {pipeline_mode = #tpu.pipeline_mode<synchronous>, transform_indices = @transform_6, window_bounds = array<i64: 1, 4>}, {pipeline_mode = #tpu.pipeline_mode<synchronous>, transform_indices = @transform_7, window_bounds = array<i64: 8, 8>}, {transform_indices = @transform_8, window_bounds = array<i64: 1, 8, 4>}]} {
    %c0_i32 = arith.constant 0 : i32
    %0 = arith.cmpi eq, %arg1, %c0_i32 : i32
    %1 = arith.extui %0 : i1 to i32
    %c0_i32_0 = arith.constant 0 : i32
    %2 = arith.cmpi ne, %1, %c0_i32_0 : i32
    scf.if %2 {
      %cst_18 = arith.constant 0.000000e+00 : f32
      %22 = vector.broadcast %cst_18 : f32 to vector<8x4xf32>
      %c0_19 = arith.constant 0 : index
      %c0_20 = arith.constant 0 : index
      %23 = vector.load %arg11[%c0_19, %c0_20] : memref<8x4xf32, #tpu.memory_space<vmem>>, vector<8x4xf32>
      tpu.vector_store %arg11[%c0_19, %c0_20], %22 {strides = array<i32>} : memref<8x4xf32, #tpu.memory_space<vmem>>, vector<8x4xf32>,
    } else {
    }
    %c0 = arith.constant 0 : index
    %c0_1 = arith.constant 0 : index
    %c0_2 = arith.constant 0 : index
    %3 = vector.load %arg2[%c0, %c0_1, %c0_2] : memref<1x4x128xf32, #tpu.memory_space<vmem>>, vector<1x4x128xf32>
    %4 = vector.shape_cast %3 : vector<1x4x128xf32> to vector<4x128xf32>
    %c0_3 = arith.constant 0 : index
    %c0_4 = arith.constant 0 : index
    %5 = vector.load %arg3[%c0_3, %c0_4] : memref<8x4xf32, #tpu.memory_space<vmem>>, vector<8x4xf32>
    %cst = arith.constant dense<0.000000e+00> : vector<8x128xf32>
    %6 = tpu.matmul %5, %4, %cst {dimension_numbers = #tpu.dot_dimension_numbers<[1], [0], [0], [1], [0, 0, 1, 1], [], []>} : vector<8x4xf32>, vector<4x128xf32>, vector<8x128xf32> -> vector<8x128xf32>
    %c0_5 = arith.constant 0 : index
    %c0_6 = arith.constant 0 : index
    %7 = vector.load %arg4[%c0_5, %c0_6] : memref<8x1xf32, #tpu.memory_space<vmem>>, vector<8x1xf32>
    %8 = vector.broadcast %7 : vector<8x1xf32> to vector<8x128xf32>
    %9 = arith.addf %6, %8 : vector<8x128xf32>
    %c0_7 = arith.constant 0 : index
    %c0_8 = arith.constant 0 : index
    %10 = vector.load %arg5[%c0_7, %c0_8] : memref<4x4xf32, #tpu.memory_space<vmem>>, vector<4x4xf32>
    %cst_9 = arith.constant dense<0.000000e+00> : vector<4x128xf32>
    %11 = tpu.matmul %10, %4, %cst_9 {dimension_numbers = #tpu.dot_dimension_numbers<[1], [0], [0], [1], [0, 0, 1, 1], [], []>} : vector<4x4xf32>, vector<4x128xf32>, vector<4x128xf32> -> vector<4x128xf32>
    %c0_10 = arith.constant 0 : index
    %c0_11 = arith.constant 0 : index
    %12 = vector.load %arg6[%c0_10, %c0_11] : memref<4x1xf32, #tpu.memory_space<vmem>>, vector<4x1xf32>
    %13 = vector.broadcast %12 : vector<4x1xf32> to vector<4x128xf32>
    %14 = arith.addf %11, %13 : vector<4x128xf32>
    %c0_12 = arith.constant 0 : index
    %c0_13 = arith.constant 0 : index
    %15 = vector.load %arg11[%c0_12, %c0_13] : memref<8x4xf32, #tpu.memory_space<vmem>>, vector<8x4xf32>
    %cst_14 = arith.constant dense<0.000000e+00> : vector<8x4xf32>
    %16 = tpu.matmul %9, %14, %cst_14 {dimension_numbers = #tpu.dot_dimension_numbers<[1], [1], [0], [0], [0, 0, 1, 0], [], []>} : vector<8x128xf32>, vector<4x128xf32>, vector<8x4xf32> -> vector<8x4xf32>
    %17 = arith.addf %15, %16 : vector<8x4xf32>
    %c0_15 = arith.constant 0 : index
    %c0_16 = arith.constant 0 : index
    %18 = vector.load %arg11[%c0_15, %c0_16] : memref<8x4xf32, #tpu.memory_space<vmem>>, vector<8x4xf32>
    tpu.vector_store %arg11[%c0_15, %c0_16], %17 {strides = array<i32>} : memref<8x4xf32, #tpu.memory_space<vmem>>, vector<8x4xf32>,
    %c1_i32 = arith.constant 1 : i32
    %19 = arith.cmpi eq, %arg1, %c1_i32 : i32
    %20 = arith.extui %19 : i1 to i32
    %c0_i32_17 = arith.constant 0 : i32
    %21 = arith.cmpi ne, %20, %c0_i32_17 : i32
    scf.if %21 {
      %c0_18 = arith.constant 0 : index
      %c0_19 = arith.constant 0 : index
      %22 = vector.load %arg11[%c0_18, %c0_19] : memref<8x4xf32, #tpu.memory_space<vmem>>, vector<8x4xf32>
      %c0_20 = arith.constant 0 : index
      %c0_21 = arith.constant 0 : index
      %23 = vector.load %arg7[%c0_20, %c0_21] : memref<4x4xf32, #tpu.memory_space<vmem>>, vector<4x4xf32>
      %cst_22 = arith.constant dense<0.000000e+00> : vector<8x4xf32>
      %24 = tpu.matmul %22, %23, %cst_22 {dimension_numbers = #tpu.dot_dimension_numbers<[1], [1], [0], [0], [0, 0, 1, 0], [], []>} : vector<8x4xf32>, vector<4x4xf32>, vector<8x4xf32> -> vector<8x4xf32>
      %c0_23 = arith.constant 0 : index
      %c0_24 = arith.constant 0 : index
      %25 = vector.load %arg8[%c0_23, %c0_24] : memref<1x4xf32, #tpu.memory_space<vmem>>, vector<1x4xf32>
      %26 = vector.broadcast %25 : vector<1x4xf32> to vector<8x4xf32>
      %27 = arith.addf %24, %26 : vector<8x4xf32>
      %28 = arith.addf %27, %22 : vector<8x4xf32>
      %cst_25 = arith.constant 0.000000e+00 : f32
      %29 = vector.broadcast %cst_25 : f32 to vector<8x4xf32>
      %30 = arith.maximumf %28, %29 : vector<8x4xf32>
      %c0_26 = arith.constant 0 : index
      %c0_27 = arith.constant 0 : index
      %31 = vector.load %arg9[%c0_26, %c0_27] : memref<8x8xf32, #tpu.memory_space<vmem>>, vector<8x8xf32>
      %cst_28 = arith.constant dense<0.000000e+00> : vector<8x4xf32>
      %32 = tpu.matmul %31, %30, %cst_28 {dimension_numbers = #tpu.dot_dimension_numbers<[1], [0], [0], [1], [0, 0, 1, 1], [], []>} : vector<8x8xf32>, vector<8x4xf32>, vector<8x4xf32> -> vector<8x4xf32>
      %c0_29 = arith.constant 0 : index
      %c0_30 = arith.constant 0 : index
      %c0_31 = arith.constant 0 : index
      %33 = vector.load %arg10[%c0_29, %c0_30, %c0_31] : memref<1x8x4xf32, #tpu.memory_space<vmem>>, vector<1x8x4xf32>
      %34 = vector.shape_cast %33 : vector<1x8x4xf32> to vector<8x4xf32>
      %35 = vector.shape_cast %32 : vector<8x4xf32> to vector<1x8x4xf32>
      tpu.vector_store %arg10[%c0_29, %c0_30, %c0_31], %35 {strides = array<i32>} : memref<1x8x4xf32, #tpu.memory_space<vmem>>, vector<1x8x4xf32>,
    } else {
    }
    return
  }
  func.func @transform_0(%arg0: i32, %arg1: i32) -> (i32, i32, i32) {
    %c0_i32 = arith.constant 0 : i32
    %c0_i32_0 = arith.constant 0 : i32
    return %arg0, %c0_i32, %arg1 : i32, i32, i32
  }
  func.func @transform_1(%arg0: i32, %arg1: i32) -> (i32, i32) {
    %c0_i32 = arith.constant 0 : i32
    %c0_i32_0 = arith.constant 0 : i32
    %c0_i32_1 = arith.constant 0 : i32
    return %c0_i32, %c0_i32_0 : i32, i32
  }
  func.func @transform_2(%arg0: i32, %arg1: i32) -> (i32, i32) {
    %c0_i32 = arith.constant 0 : i32
    %c0_i32_0 = arith.constant 0 : i32
    %c0_i32_1 = arith.constant 0 : i32
    return %c0_i32, %c0_i32_0 : i32, i32
  }
  func.func @transform_3(%arg0: i32, %arg1: i32) -> (i32, i32) {
    %c0_i32 = arith.constant 0 : i32
    %c0_i32_0 = arith.constant 0 : i32
    %c0_i32_1 = arith.constant 0 : i32
    return %c0_i32, %c0_i32_0 : i32, i32
  }
  func.func @transform_4(%arg0: i32, %arg1: i32) -> (i32, i32) {
    %c0_i32 = arith.constant 0 : i32
    %c0_i32_0 = arith.constant 0 : i32
    %c0_i32_1 = arith.constant 0 : i32
    return %c0_i32, %c0_i32_0 : i32, i32
  }
  func.func @transform_5(%arg0: i32, %arg1: i32) -> (i32, i32) {
    %c0_i32 = arith.constant 0 : i32
    %c0_i32_0 = arith.constant 0 : i32
    %c0_i32_1 = arith.constant 0 : i32
    return %c0_i32, %c0_i32_0 : i32, i32
  }
  func.func @transform_6(%arg0: i32, %arg1: i32) -> (i32, i32) {
    %c0_i32 = arith.constant 0 : i32
    %c0_i32_0 = arith.constant 0 : i32
    %c0_i32_1 = arith.constant 0 : i32
    return %c0_i32, %c0_i32_0 : i32, i32
  }
  func.func @transform_7(%arg0: i32, %arg1: i32) -> (i32, i32) {
    %c0_i32 = arith.constant 0 : i32
    %c0_i32_0 = arith.constant 0 : i32
    %c0_i32_1 = arith.constant 0 : i32
    return %c0_i32, %c0_i32_0 : i32, i32
  }
  func.func @transform_8(%arg0: i32, %arg1: i32) -> (i32, i32, i32) {
    %c0_i32 = arith.constant 0 : i32
    %c0_i32_0 = arith.constant 0 : i32
    %c0_i32_1 = arith.constant 0 : i32
    return %arg0, %c0_i32, %c0_i32_0 : i32, i32, i32
  }
}

module attributes {stable_mosaic.version = 11 : i64} {
  func.func @glore_backproj_kernel(%arg0: i32, %arg1: i32, %arg2: memref<1x4x128xf32, #tpu.memory_space<vmem>>, %arg3: memref<1x8x4xf32, #tpu.memory_space<vmem>>, %arg4: memref<4x4xf32, #tpu.memory_space<vmem>>, %arg5: memref<4x1xf32, #tpu.memory_space<vmem>>, %arg6: memref<4x8xf32, #tpu.memory_space<vmem>>, %arg7: memref<1x4x128xf32, #tpu.memory_space<vmem>>, %arg8: memref<1x4x1xf32, #tpu.memory_space<vmem>>, %arg9: memref<1x4x1xf32, #tpu.memory_space<vmem>>) attributes {dimension_semantics = [#tpu.dimension_semantics<parallel>, #tpu.dimension_semantics<arbitrary>], iteration_bounds = array<i64: 2, 2>, scalar_prefetch = 0 : i64, scratch_operands = 0 : i64, tpu.core_type = #tpu.core_type<tc>, window_params = [{transform_indices = @transform_0, window_bounds = array<i64: 1, 4, 128>}, {transform_indices = @transform_1, window_bounds = array<i64: 1, 8, 4>}, {pipeline_mode = #tpu.pipeline_mode<synchronous>, transform_indices = @transform_2, window_bounds = array<i64: 4, 4>}, {pipeline_mode = #tpu.pipeline_mode<synchronous>, transform_indices = @transform_3, window_bounds = array<i64: 4, 1>}, {pipeline_mode = #tpu.pipeline_mode<synchronous>, transform_indices = @transform_4, window_bounds = array<i64: 4, 8>}, {transform_indices = @transform_5, window_bounds = array<i64: 1, 4, 128>}, {transform_indices = @transform_6, window_bounds = array<i64: 1, 4, 1>}, {transform_indices = @transform_7, window_bounds = array<i64: 1, 4, 1>}]} {
    %c0_i32 = arith.constant 0 : i32
    %0 = arith.cmpi eq, %arg1, %c0_i32 : i32
    %1 = arith.extui %0 : i1 to i32
    %c0_i32_0 = arith.constant 0 : i32
    %2 = arith.cmpi ne, %1, %c0_i32_0 : i32
    scf.if %2 {
      %cst_31 = arith.constant 0.000000e+00 : f32
      %35 = vector.broadcast %cst_31 : f32 to vector<1x4x1xf32>
      %c0_32 = arith.constant 0 : index
      %c0_33 = arith.constant 0 : index
      %c0_34 = arith.constant 0 : index
      %36 = vector.load %arg8[%c0_32, %c0_33, %c0_34] : memref<1x4x1xf32, #tpu.memory_space<vmem>>, vector<1x4x1xf32>
      tpu.vector_store %arg8[%c0_32, %c0_33, %c0_34], %35 {strides = array<i32>} : memref<1x4x1xf32, #tpu.memory_space<vmem>>, vector<1x4x1xf32>,
      %cst_35 = arith.constant 0.000000e+00 : f32
      %37 = vector.broadcast %cst_35 : f32 to vector<1x4x1xf32>
      %c0_36 = arith.constant 0 : index
      %c0_37 = arith.constant 0 : index
      %c0_38 = arith.constant 0 : index
      %38 = vector.load %arg9[%c0_36, %c0_37, %c0_38] : memref<1x4x1xf32, #tpu.memory_space<vmem>>, vector<1x4x1xf32>
      tpu.vector_store %arg9[%c0_36, %c0_37, %c0_38], %37 {strides = array<i32>} : memref<1x4x1xf32, #tpu.memory_space<vmem>>, vector<1x4x1xf32>,
    } else {
    }
    %c0 = arith.constant 0 : index
    %c0_1 = arith.constant 0 : index
    %c0_2 = arith.constant 0 : index
    %3 = vector.load %arg2[%c0, %c0_1, %c0_2] : memref<1x4x128xf32, #tpu.memory_space<vmem>>, vector<1x4x128xf32>
    %4 = vector.shape_cast %3 : vector<1x4x128xf32> to vector<4x128xf32>
    %c0_3 = arith.constant 0 : index
    %c0_4 = arith.constant 0 : index
    %c0_5 = arith.constant 0 : index
    %5 = vector.load %arg3[%c0_3, %c0_4, %c0_5] : memref<1x8x4xf32, #tpu.memory_space<vmem>>, vector<1x8x4xf32>
    %6 = vector.shape_cast %5 : vector<1x8x4xf32> to vector<8x4xf32>
    %c0_6 = arith.constant 0 : index
    %c0_7 = arith.constant 0 : index
    %7 = vector.load %arg4[%c0_6, %c0_7] : memref<4x4xf32, #tpu.memory_space<vmem>>, vector<4x4xf32>
    %cst = arith.constant dense<0.000000e+00> : vector<4x128xf32>
    %8 = tpu.matmul %7, %4, %cst {dimension_numbers = #tpu.dot_dimension_numbers<[1], [0], [0], [1], [0, 0, 1, 1], [], []>} : vector<4x4xf32>, vector<4x128xf32>, vector<4x128xf32> -> vector<4x128xf32>
    %c0_8 = arith.constant 0 : index
    %c0_9 = arith.constant 0 : index
    %9 = vector.load %arg5[%c0_8, %c0_9] : memref<4x1xf32, #tpu.memory_space<vmem>>, vector<4x1xf32>
    %10 = vector.broadcast %9 : vector<4x1xf32> to vector<4x128xf32>
    %11 = arith.addf %8, %10 : vector<4x128xf32>
    %cst_10 = arith.constant dense<0.000000e+00> : vector<8x128xf32>
    %12 = tpu.matmul %6, %11, %cst_10 {dimension_numbers = #tpu.dot_dimension_numbers<[1], [0], [0], [1], [0, 0, 1, 1], [], []>} : vector<8x4xf32>, vector<4x128xf32>, vector<8x128xf32> -> vector<8x128xf32>
    %c0_11 = arith.constant 0 : index
    %c0_12 = arith.constant 0 : index
    %13 = vector.load %arg6[%c0_11, %c0_12] : memref<4x8xf32, #tpu.memory_space<vmem>>, vector<4x8xf32>
    %cst_13 = arith.constant dense<0.000000e+00> : vector<4x128xf32>
    %14 = tpu.matmul %13, %12, %cst_13 {dimension_numbers = #tpu.dot_dimension_numbers<[1], [0], [0], [1], [0, 0, 1, 1], [], []>} : vector<4x8xf32>, vector<8x128xf32>, vector<4x128xf32> -> vector<4x128xf32>
    %c0_14 = arith.constant 0 : index
    %c0_15 = arith.constant 0 : index
    %c0_16 = arith.constant 0 : index
    %15 = vector.load %arg7[%c0_14, %c0_15, %c0_16] : memref<1x4x128xf32, #tpu.memory_space<vmem>>, vector<1x4x128xf32>
    %16 = vector.shape_cast %15 : vector<1x4x128xf32> to vector<4x128xf32>
    %17 = vector.shape_cast %14 : vector<4x128xf32> to vector<1x4x128xf32>
    tpu.vector_store %arg7[%c0_14, %c0_15, %c0_16], %17 {strides = array<i32>} : memref<1x4x128xf32, #tpu.memory_space<vmem>>, vector<1x4x128xf32>,
    %c0_17 = arith.constant 0 : index
    %c0_18 = arith.constant 0 : index
    %c0_19 = arith.constant 0 : index
    %18 = vector.load %arg8[%c0_17, %c0_18, %c0_19] : memref<1x4x1xf32, #tpu.memory_space<vmem>>, vector<1x4x1xf32>
    %19 = vector.shape_cast %18 : vector<1x4x1xf32> to vector<4x1xf32>
    %cst_20 = arith.constant dense<0.000000e+00> : vector<4xf32>
    %20 = vector.multi_reduction <add>, %14, %cst_20 [1] : vector<4x128xf32> to vector<4xf32>
    %21 = vector.shape_cast %20 : vector<4xf32> to vector<4x1xf32>
    %22 = arith.addf %19, %21 : vector<4x1xf32>
    %c0_21 = arith.constant 0 : index
    %c0_22 = arith.constant 0 : index
    %c0_23 = arith.constant 0 : index
    %23 = vector.load %arg8[%c0_21, %c0_22, %c0_23] : memref<1x4x1xf32, #tpu.memory_space<vmem>>, vector<1x4x1xf32>
    %24 = vector.shape_cast %23 : vector<1x4x1xf32> to vector<4x1xf32>
    %25 = vector.shape_cast %22 : vector<4x1xf32> to vector<1x4x1xf32>
    tpu.vector_store %arg8[%c0_21, %c0_22, %c0_23], %25 {strides = array<i32>} : memref<1x4x1xf32, #tpu.memory_space<vmem>>, vector<1x4x1xf32>,
    %c0_24 = arith.constant 0 : index
    %c0_25 = arith.constant 0 : index
    %c0_26 = arith.constant 0 : index
    %26 = vector.load %arg9[%c0_24, %c0_25, %c0_26] : memref<1x4x1xf32, #tpu.memory_space<vmem>>, vector<1x4x1xf32>
    %27 = vector.shape_cast %26 : vector<1x4x1xf32> to vector<4x1xf32>
    %28 = arith.mulf %14, %14 : vector<4x128xf32>
    %cst_27 = arith.constant dense<0.000000e+00> : vector<4xf32>
    %29 = vector.multi_reduction <add>, %28, %cst_27 [1] : vector<4x128xf32> to vector<4xf32>
    %30 = vector.shape_cast %29 : vector<4xf32> to vector<4x1xf32>
    %31 = arith.addf %27, %30 : vector<4x1xf32>
    %c0_28 = arith.constant 0 : index
    %c0_29 = arith.constant 0 : index
    %c0_30 = arith.constant 0 : index
    %32 = vector.load %arg9[%c0_28, %c0_29, %c0_30] : memref<1x4x1xf32, #tpu.memory_space<vmem>>, vector<1x4x1xf32>
    %33 = vector.shape_cast %32 : vector<1x4x1xf32> to vector<4x1xf32>
    %34 = vector.shape_cast %31 : vector<4x1xf32> to vector<1x4x1xf32>
    tpu.vector_store %arg9[%c0_28, %c0_29, %c0_30], %34 {strides = array<i32>} : memref<1x4x1xf32, #tpu.memory_space<vmem>>, vector<1x4x1xf32>,
    return
  }
  func.func @transform_0(%arg0: i32, %arg1: i32) -> (i32, i32, i32) {
    %c0_i32 = arith.constant 0 : i32
    %c0_i32_0 = arith.constant 0 : i32
    return %arg0, %c0_i32, %arg1 : i32, i32, i32
  }
  func.func @transform_1(%arg0: i32, %arg1: i32) -> (i32, i32, i32) {
    %c0_i32 = arith.constant 0 : i32
    %c0_i32_0 = arith.constant 0 : i32
    %c0_i32_1 = arith.constant 0 : i32
    return %arg0, %c0_i32, %c0_i32_0 : i32, i32, i32
  }
  func.func @transform_2(%arg0: i32, %arg1: i32) -> (i32, i32) {
    %c0_i32 = arith.constant 0 : i32
    %c0_i32_0 = arith.constant 0 : i32
    %c0_i32_1 = arith.constant 0 : i32
    return %c0_i32, %c0_i32_0 : i32, i32
  }
  func.func @transform_3(%arg0: i32, %arg1: i32) -> (i32, i32) {
    %c0_i32 = arith.constant 0 : i32
    %c0_i32_0 = arith.constant 0 : i32
    %c0_i32_1 = arith.constant 0 : i32
    return %c0_i32, %c0_i32_0 : i32, i32
  }
  func.func @transform_4(%arg0: i32, %arg1: i32) -> (i32, i32) {
    %c0_i32 = arith.constant 0 : i32
    %c0_i32_0 = arith.constant 0 : i32
    %c0_i32_1 = arith.constant 0 : i32
    return %c0_i32, %c0_i32_0 : i32, i32
  }
  func.func @transform_5(%arg0: i32, %arg1: i32) -> (i32, i32, i32) {
    %c0_i32 = arith.constant 0 : i32
    %c0_i32_0 = arith.constant 0 : i32
    return %arg0, %c0_i32, %arg1 : i32, i32, i32
  }
  func.func @transform_6(%arg0: i32, %arg1: i32) -> (i32, i32, i32) {
    %c0_i32 = arith.constant 0 : i32
    %c0_i32_0 = arith.constant 0 : i32
    %c0_i32_1 = arith.constant 0 : i32
    return %arg0, %c0_i32, %c0_i32_0 : i32, i32, i32
  }
  func.func @transform_7(%arg0: i32, %arg1: i32) -> (i32, i32, i32) {
    %c0_i32 = arith.constant 0 : i32
    %c0_i32_0 = arith.constant 0 : i32
    %c0_i32_1 = arith.constant 0 : i32
    return %arg0, %c0_i32, %c0_i32_0 : i32, i32, i32
  }
}

module attributes {stable_mosaic.version = 11 : i64} {
  func.func @bn_residual_kernel(%arg0: i32, %arg1: i32, %arg2: memref<1x4x128xf32, #tpu.memory_space<vmem>>, %arg3: memref<1x4x128xf32, #tpu.memory_space<vmem>>, %arg4: memref<1x4x1xf32, #tpu.memory_space<vmem>>, %arg5: memref<1x4x1xf32, #tpu.memory_space<vmem>>, %arg6: memref<1x4x128xf32, #tpu.memory_space<vmem>>) attributes {dimension_semantics = [#tpu.dimension_semantics<parallel>, #tpu.dimension_semantics<parallel>], iteration_bounds = array<i64: 2, 2>, scalar_prefetch = 0 : i64, scratch_operands = 0 : i64, tpu.core_type = #tpu.core_type<tc>, window_params = [{transform_indices = @transform_0, window_bounds = array<i64: 1, 4, 128>}, {transform_indices = @transform_1, window_bounds = array<i64: 1, 4, 128>}, {pipeline_mode = #tpu.pipeline_mode<synchronous>, transform_indices = @transform_2, window_bounds = array<i64: 1, 4, 1>}, {pipeline_mode = #tpu.pipeline_mode<synchronous>, transform_indices = @transform_3, window_bounds = array<i64: 1, 4, 1>}, {transform_indices = @transform_4, window_bounds = array<i64: 1, 4, 128>}]} {
    %c0 = arith.constant 0 : index
    %c0_0 = arith.constant 0 : index
    %c0_1 = arith.constant 0 : index
    %0 = vector.load %arg2[%c0, %c0_0, %c0_1] : memref<1x4x128xf32, #tpu.memory_space<vmem>>, vector<1x4x128xf32>
    %c0_2 = arith.constant 0 : index
    %c0_3 = arith.constant 0 : index
    %c0_4 = arith.constant 0 : index
    %1 = vector.load %arg3[%c0_2, %c0_3, %c0_4] : memref<1x4x128xf32, #tpu.memory_space<vmem>>, vector<1x4x128xf32>
    %c0_5 = arith.constant 0 : index
    %c0_6 = arith.constant 0 : index
    %c0_7 = arith.constant 0 : index
    %2 = vector.load %arg4[%c0_5, %c0_6, %c0_7] : memref<1x4x1xf32, #tpu.memory_space<vmem>>, vector<1x4x1xf32>
    %3 = vector.broadcast %2 : vector<1x4x1xf32> to vector<1x4x128xf32>
    %4 = arith.mulf %1, %3 : vector<1x4x128xf32>
    %5 = arith.addf %0, %4 : vector<1x4x128xf32>
    %c0_8 = arith.constant 0 : index
    %c0_9 = arith.constant 0 : index
    %c0_10 = arith.constant 0 : index
    %6 = vector.load %arg5[%c0_8, %c0_9, %c0_10] : memref<1x4x1xf32, #tpu.memory_space<vmem>>, vector<1x4x1xf32>
    %7 = vector.broadcast %6 : vector<1x4x1xf32> to vector<1x4x128xf32>
    %8 = arith.addf %5, %7 : vector<1x4x128xf32>
    %c0_11 = arith.constant 0 : index
    %c0_12 = arith.constant 0 : index
    %c0_13 = arith.constant 0 : index
    %9 = vector.load %arg6[%c0_11, %c0_12, %c0_13] : memref<1x4x128xf32, #tpu.memory_space<vmem>>, vector<1x4x128xf32>
    tpu.vector_store %arg6[%c0_11, %c0_12, %c0_13], %8 {strides = array<i32>} : memref<1x4x128xf32, #tpu.memory_space<vmem>>, vector<1x4x128xf32>,
    return
  }
  func.func @transform_0(%arg0: i32, %arg1: i32) -> (i32, i32, i32) {
    %c0_i32 = arith.constant 0 : i32
    %c0_i32_0 = arith.constant 0 : i32
    return %arg0, %c0_i32, %arg1 : i32, i32, i32
  }
  func.func @transform_1(%arg0: i32, %arg1: i32) -> (i32, i32, i32) {
    %c0_i32 = arith.constant 0 : i32
    %c0_i32_0 = arith.constant 0 : i32
    return %arg0, %c0_i32, %arg1 : i32, i32, i32
  }
  func.func @transform_2(%arg0: i32, %arg1: i32) -> (i32, i32, i32) {
    %c0_i32 = arith.constant 0 : i32
    %c0_i32_0 = arith.constant 0 : i32
    %c0_i32_1 = arith.constant 0 : i32
    %c0_i32_2 = arith.constant 0 : i32
    return %c0_i32, %c0_i32_0, %c0_i32_1 : i32, i32, i32
  }
  func.func @transform_3(%arg0: i32, %arg1: i32) -> (i32, i32, i32) {
    %c0_i32 = arith.constant 0 : i32
    %c0_i32_0 = arith.constant 0 : i32
    %c0_i32_1 = arith.constant 0 : i32
    %c0_i32_2 = arith.constant 0 : i32
    return %c0_i32, %c0_i32_0, %c0_i32_1 : i32, i32, i32
  }
  func.func @transform_4(%arg0: i32, %arg1: i32) -> (i32, i32, i32) {
    %c0_i32 = arith.constant 0 : i32
    %c0_i32_0 = arith.constant 0 : i32
    return %arg0, %c0_i32, %arg1 : i32, i32, i32
  }
}

</mosaic_0001>

<llo_original>
// kernel: glore_unit_forward.3
$region0: #{glore_unit_forward.3}
  #allocation0 [shape = 'u32[]', space=smem, size = 0x4, offset = 0x4, fixed_abs, tag = 'smem constant byte address 0x4 - core index']
  #allocation1 [shape = 'u32[72,128]{1,0:T(1,128)}', space=vmem, size = 0x9000, scoped, tag = 'internal scratch']
  #allocation2 [shape = 'f32[8,4]{1,0:T(8,128)}', space=vmem, size = 0x1000, scoped, tag = 'scratch operand']
  %s0 = inlined_call_operand.vmem [shape: f32[2,4,256], index: 0, kind: input, shape index: {}]
  %s1 = inlined_call_operand.vmem [shape: f32[8,4], index: 1, kind: input, shape index: {}]
  %s2 = inlined_call_operand.vmem [shape: f32[8,1], index: 2, kind: input, shape index: {}]
  %s3 = inlined_call_operand.vmem [shape: f32[4,4], index: 3, kind: input, shape index: {}]
  %s4 = inlined_call_operand.vmem [shape: f32[4,1], index: 4, kind: input, shape index: {}]
  %s5 = inlined_call_operand.vmem [shape: f32[4,4], index: 5, kind: input, shape index: {}]
  %s6 = inlined_call_operand.vmem [shape: f32[1,4], index: 6, kind: input, shape index: {}]
  %s7 = inlined_call_operand.vmem [shape: f32[8,8], index: 7, kind: input, shape index: {}]
  %s8 = inlined_call_operand.vmem [shape: f32[2,8,4], index: 8, kind: output, shape index: {}]
  %s9 = sld [smem:[#allocation0]]
  $region73: #{glore_unit_forward.3} parent=0
    _
  %s11 = ssub.s32 1, %s9
  %s12 = scalar_select 0, %s11, %s9
  loop: start=0, step=1, limit=6
  $region2: #{glore_unit_forward.3} parent=0 // loop_pre_header
    _
  $region3: #{glore_unit_forward.3} parent=0 // loop_header
    %s14 = sphi 0, %s18
    %p15 = scmp.ge.s32.totalorder %s14, 6
    %s21 = sphi 0, %s33
    %s22 = sphi 0, %s29
    %s23 = sphi 0, %s21
    %s24 = sphi 0, %s22
    %s25 = sphi 0, %s23
    %s26 = sphi 0, %s24
    %s38 = sphi 0, %s40
    %s41 = sphi 0, %s38
    %s42 = sphi 0, %s41
    %s58 = sphi 0, %s42
    %s62 = sphi 0, %s62
    %s64 = sphi 0, %s62
    %s65 = sphi 0, %s64
    %s79 = sphi 0, %s65
    %s83 = sphi 0, %s83
    %s85 = sphi 0, %s83
    %s86 = sphi 0, %s85
    %s100 = sphi 0, %s86
    %s104 = sphi 0, %s104
    %s106 = sphi 0, %s104
    %s107 = sphi 0, %s106
    %s121 = sphi 0, %s107
    %s125 = sphi 0, %s125
    %s127 = sphi 0, %s125
    %s128 = sphi 0, %s127
    %s142 = sphi 0, %s128
    %s146 = sphi 0, %s146
    %s148 = sphi 0, %s146
    %s149 = sphi 0, %s148
    %s163 = sphi 0, %s149
    %s167 = sphi 0, %s167
    %s169 = sphi 0, %s167
    %s170 = sphi 0, %s169
    %s184 = sphi 0, %s170
    %s188 = sphi 0, %s188
    %s190 = sphi 0, %s188
    %s191 = sphi 0, %s190
    %s205 = sphi 0, %s191
    %s211 = sphi 0, %s213
    %s214 = sphi 0, %s211
    %s215 = sphi 0, %s214
    %s231 = sphi 0, %s215
  $region4: #{glore_unit_forward.3} parent=0 // loop_header_branch
    %17 = sbr.rel (%p15) target = $region8
  $region5: #{glore_unit_forward.3} parent=0 // loop_body
    %s19 = ssub.s32 %s14, 1
    %s20 = ssub.s32 %s14, 2
    %s27 = sadd.s32 1, %s22
    %p28 = scmp.ge.s32.totalorder %s27, 2
    %s29 = scalar_select %p28, 0, %s27
    %s30 = sadd.s32 1, %s21
    %s31 = scalar_select %p28, %s30, %s21
    %p32 = scmp.ge.s32.totalorder %s31, 2
    %s33 = scalar_select %p32, 0, %s31
    %s34 = ssub.s32 %s21, %s33
    %s35 = ssub.s32 %s22, %s29
    %s36 = sor.u32 %s34, %s35
    %p37 = scmp.eq.s32.totalorder %s36, 0
    %s39 = sadd.s32 %s38, 1
    %s40 = scalar_select %p37, %s38, %s39
    %p43 = pneg %p37
    %p44 = scmp.eq.s32.totalorder %s14, 3
    %p45 = por %p43, %p44
    %p46 = scmp.ne.s32.totalorder %s38, %s41
    %p47 = scmp.eq.s32.totalorder %s14, 0
    %p48 = por %p46, %p47
    %p49 = scmp.ne.s32.totalorder %s38, %s41
    %p50 = scmp.eq.s32.totalorder %s19, 3
    %p51 = por %p49, %p50
    %p52 = scmp.ne.s32.totalorder %s41, %s42
    %p53 = scmp.eq.s32.totalorder %s19, 0
    %p54 = por %p52, %p53
    %p55 = scmp.ne.s32.totalorder %s41, %s42
    %p56 = scmp.eq.s32.totalorder %s20, 3
    %p57 = por %p55, %p56
    %p59 = scmp.ne.s32.totalorder %s42, %s58
    %p60 = scmp.eq.s32.totalorder %s20, 0
    %p61 = por %p59, %p60
    %s63 = sadd.s32 %s62, 1
    %p66 = scmp.eq.s32.totalorder %s14, 3
    %p67 = scmp.ne.s32.totalorder %s62, %s64
    %p68 = scmp.eq.s32.totalorder %s14, 0
    %p69 = por %p67, %p68
    %p70 = scmp.ne.s32.totalorder %s62, %s64
    %p71 = scmp.eq.s32.totalorder %s19, 3
    %p72 = por %p70, %p71
    %p73 = scmp.ne.s32.totalorder %s64, %s65
    %p74 = scmp.eq.s32.totalorder %s19, 0
    %p75 = por %p73, %p74
    %p76 = scmp.ne.s32.totalorder %s64, %s65
    %p77 = scmp.eq.s32.totalorder %s20, 3
    %p78 = por %p76, %p77
    %p80 = scmp.ne.s32.totalorder %s65, %s79
    %p81 = scmp.eq.s32.totalorder %s20, 0
    %p82 = por %p80, %p81
    %s84 = sadd.s32 %s83, 1
    %p87 = scmp.eq.s32.totalorder %s14, 3
    %p88 = scmp.ne.s32.totalorder %s83, %s85
    %p89 = scmp.eq.s32.totalorder %s14, 0
    %p90 = por %p88, %p89
    %p91 = scmp.ne.s32.totalorder %s83, %s85
    %p92 = scmp.eq.s32.totalorder %s19, 3
    %p93 = por %p91, %p92
    %p94 = scmp.ne.s32.totalorder %s85, %s86
    %p95 = scmp.eq.s32.totalorder %s19, 0
    %p96 = por %p94, %p95
    %p97 = scmp.ne.s32.totalorder %s85, %s86
    %p98 = scmp.eq.s32.totalorder %s20, 3
    %p99 = por %p97, %p98
    %p101 = scmp.ne.s32.totalorder %s86, %s100
    %p102 = scmp.eq.s32.totalorder %s20, 0
    %p103 = por %p101, %p102
    %s105 = sadd.s32 %s104, 1
    %p108 = scmp.eq.s32.totalorder %s14, 3
    %p109 = scmp.ne.s32.totalorder %s104, %s106
    %p110 = scmp.eq.s32.totalorder %s14, 0
    %p111 = por %p109, %p110
    %p112 = scmp.ne.s32.totalorder %s104, %s106
    %p113 = scmp.eq.s32.totalorder %s19, 3
    %p114 = por %p112, %p113
    %p115 = scmp.ne.s32.totalorder %s106, %s107
    %p116 = scmp.eq.s32.totalorder %s19, 0
    %p117 = por %p115, %p116
    %p118 = scmp.ne.s32.totalorder %s106, %s107
    %p119 = scmp.eq.s32.totalorder %s20, 3
    %p120 = por %p118, %p119
    %p122 = scmp.ne.s32.totalorder %s107, %s121
    %p123 = scmp.eq.s32.totalorder %s20, 0
    %p124 = por %p122, %p123
    %s126 = sadd.s32 %s125, 1
    %p129 = scmp.eq.s32.totalorder %s14, 3
    %p130 = scmp.ne.s32.totalorder %s125, %s127
    %p131 = scmp.eq.s32.totalorder %s14, 0
    %p132 = por %p130, %p131
    %p133 = scmp.ne.s32.totalorder %s125, %s127
    %p134 = scmp.eq.s32.totalorder %s19, 3
    %p135 = por %p133, %p134
    %p136 = scmp.ne.s32.totalorder %s127, %s128
    %p137 = scmp.eq.s32.totalorder %s19, 0
    %p138 = por %p136, %p137
    %p139 = scmp.ne.s32.totalorder %s127, %s128
    %p140 = scmp.eq.s32.totalorder %s20, 3
    %p141 = por %p139, %p140
    %p143 = scmp.ne.s32.totalorder %s128, %s142
    %p144 = scmp.eq.s32.totalorder %s20, 0
    %p145 = por %p143, %p144
    %s147 = sadd.s32 %s146, 1
    %p150 = scmp.eq.s32.totalorder %s14, 3
    %p151 = scmp.ne.s32.totalorder %s146, %s148
    %p152 = scmp.eq.s32.totalorder %s14, 0
    %p153 = por %p151, %p152
    %p154 = scmp.ne.s32.totalorder %s146, %s148
    %p155 = scmp.eq.s32.totalorder %s19, 3
    %p156 = por %p154, %p155
    %p157 = scmp.ne.s32.totalorder %s148, %s149
    %p158 = scmp.eq.s32.totalorder %s19, 0
    %p159 = por %p157, %p158
    %p160 = scmp.ne.s32.totalorder %s148, %s149
    %p161 = scmp.eq.s32.totalorder %s20, 3
    %p162 = por %p160, %p161
    %p164 = scmp.ne.s32.totalorder %s149, %s163
    %p165 = scmp.eq.s32.totalorder %s20, 0
    %p166 = por %p164, %p165
    %s168 = sadd.s32 %s167, 1
    %p171 = scmp.eq.s32.totalorder %s14, 3
    %p172 = scmp.ne.s32.totalorder %s167, %s169
    %p173 = scmp.eq.s32.totalorder %s14, 0
    %p174 = por %p172, %p173
    %p175 = scmp.ne.s32.totalorder %s167, %s169
    %p176 = scmp.eq.s32.totalorder %s19, 3
    %p177 = por %p175, %p176
    %p178 = scmp.ne.s32.totalorder %s169, %s170
    %p179 = scmp.eq.s32.totalorder %s19, 0
    %p180 = por %p178, %p179
    %p181 = scmp.ne.s32.totalorder %s169, %s170
    %p182 = scmp.eq.s32.totalorder %s20, 3
    %p183 = por %p181, %p182
    %p185 = scmp.ne.s32.totalorder %s170, %s184
    %p186 = scmp.eq.s32.totalorder %s20, 0
    %p187 = por %p185, %p186
    %s189 = sadd.s32 %s188, 1
    %p192 = scmp.eq.s32.totalorder %s14, 3
    %p193 = scmp.ne.s32.totalorder %s188, %s190
    %p194 = scmp.eq.s32.totalorder %s14, 0
    %p195 = por %p193, %p194
    %p196 = scmp.ne.s32.totalorder %s188, %s190
    %p197 = scmp.eq.s32.totalorder %s19, 3
    %p198 = por %p196, %p197
    %p199 = scmp.ne.s32.totalorder %s190, %s191
    %p200 = scmp.eq.s32.totalorder %s19, 0
    %p201 = por %p199, %p200
    %p202 = scmp.ne.s32.totalorder %s190, %s191
    %p203 = scmp.eq.s32.totalorder %s20, 3
    %p204 = por %p202, %p203
    %p206 = scmp.ne.s32.totalorder %s191, %s205
    %p207 = scmp.eq.s32.totalorder %s20, 0
    %p208 = por %p206, %p207
    %s209 = ssub.s32 %s21, %s33
    %p210 = scmp.eq.s32.totalorder %s209, 0
    %s212 = sadd.s32 %s211, 1
    %s213 = scalar_select %p210, %s211, %s212
    %p216 = pneg %p210
    %p217 = scmp.eq.s32.totalorder %s14, 3
    %p218 = por %p216, %p217
    %p219 = scmp.ne.s32.totalorder %s211, %s214
    %p220 = scmp.eq.s32.totalorder %s14, 0
    %p221 = por %p219, %p220
    %p222 = scmp.ne.s32.totalorder %s211, %s214
    %p223 = scmp.eq.s32.totalorder %s19, 3
    %p224 = por %p222, %p223
    %p225 = scmp.ne.s32.totalorder %s214, %s215
    %p226 = scmp.eq.s32.totalorder %s19, 0
    %p227 = por %p225, %p226
    %p228 = scmp.ne.s32.totalorder %s214, %s215
    %p229 = scmp.eq.s32.totalorder %s20, 3
    %p230 = por %p228, %p229
    %p232 = scmp.ne.s32.totalorder %s215, %s231
    %p233 = scmp.eq.s32.totalorder %s20, 0
    %p234 = por %p232, %p233
    %p235 = scmp.le.s32.totalorder 1, %s14
    %p236 = scmp.lt.s32.totalorder %s14, 5
    %p237 = pnand %p235, %p236
    %p238 = pneg %p237
    // Predicated region
    $region9: #{glore_unit_forward.3} parent=5 // pred_check
      _
    $region10: #{glore_unit_forward.3} parent=5 // pred_check_branch
      %240 = sbr.rel (%p237) target = $region12
    $region11: #{glore_unit_forward.3} parent=5 // pred_region
      %s241 = ssub.s32 %s14, 1
      // Predicated region
      $region13: #{glore_unit_forward.3} parent=11 // pred_check
        %p242 = pneg %p75
      $region14: #{glore_unit_forward.3} parent=11 // pred_check_branch
        %244 = sbr.rel (%p242) target = $region16
      $region15: #{glore_unit_forward.3} parent=11 // pred_region
        _
      $region16: #{glore_unit_forward.3} parent=11 // pred_fallthru
        _
      // Predicated region
      $region17: #{glore_unit_forward.3} parent=11 // pred_check
        %p245 = pneg %p96
      $region18: #{glore_unit_forward.3} parent=11 // pred_check_branch
        %247 = sbr.rel (%p245) target = $region20
      $region19: #{glore_unit_forward.3} parent=11 // pred_region
        _
      $region20: #{glore_unit_forward.3} parent=11 // pred_fallthru
        _
      // Predicated region
      $region21: #{glore_unit_forward.3} parent=11 // pred_check
        %p248 = pneg %p117
      $region22: #{glore_unit_forward.3} parent=11 // pred_check_branch
        %250 = sbr.rel (%p248) target = $region24
      $region23: #{glore_unit_forward.3} parent=11 // pred_region
        _
      $region24: #{glore_unit_forward.3} parent=11 // pred_fallthru
        _
      // Predicated region
      $region25: #{glore_unit_forward.3} parent=11 // pred_check
        %p251 = pneg %p138
      $region26: #{glore_unit_forward.3} parent=11 // pred_check_branch
        %253 = sbr.rel (%p251) target = $region28
      $region27: #{glore_unit_forward.3} parent=11 // pred_region
        _
      $region28: #{glore_unit_forward.3} parent=11 // pred_fallthru
        _
      // Predicated region
      $region29: #{glore_unit_forward.3} parent=11 // pred_check
        %p254 = pneg %p159
      $region30: #{glore_unit_forward.3} parent=11 // pred_check_branch
        %256 = sbr.rel (%p254) target = $region32
      $region31: #{glore_unit_forward.3} parent=11 // pred_region
        _
      $region32: #{glore_unit_forward.3} parent=11 // pred_fallthru
        _
      // Predicated region
      $region33: #{glore_unit_forward.3} parent=11 // pred_check
        %p257 = pneg %p180
      $region34: #{glore_unit_forward.3} parent=11 // pred_check_branch
        %259 = sbr.rel (%p257) target = $region36
      $region35: #{glore_unit_forward.3} parent=11 // pred_region
        _
      $region36: #{glore_unit_forward.3} parent=11 // pred_fallthru
        _
      // Predicated region
      $region37: #{glore_unit_forward.3} parent=11 // pred_check
        %p260 = pneg %p201
      $region38: #{glore_unit_forward.3} parent=11 // pred_check_branch
        %262 = sbr.rel (%p260) target = $region40
      $region39: #{glore_unit_forward.3} parent=11 // pred_region
        _
      $region40: #{glore_unit_forward.3} parent=11 // pred_fallthru
        _
    $region12: #{glore_unit_forward.3} parent=5 // pred_fallthru
      _
    %p263 = scmp.lt.s32.totalorder %s14, 4
    // Predicated region
    $region41: #{glore_unit_forward.3} parent=5 // pred_check
      %p264 = pneg %p263
    $region42: #{glore_unit_forward.3} parent=5 // pred_check_branch
      %266 = sbr.rel (%p264) target = $region44
    $region43: #{glore_unit_forward.3} parent=5 // pred_region
      // Predicated region
      $region45: #{glore_unit_forward.3} parent=43 // pred_check
        %p267 = pneg %p48
      $region46: #{glore_unit_forward.3} parent=43 // pred_check_branch
        %269 = sbr.rel (%p267) target = $region48
      $region47: #{glore_unit_forward.3} parent=43 // pred_region
        %p270 = scmp.lt.s32.totalorder %s21, 1
        %s271 = scalar_select %p270, %s21, 1
        %p272 = scmp.lt.s32.totalorder %s22, 1
        %s273 = scalar_select %p272, %s22, 1
        %s274 = smul.addr %s271, 2
        %s275 = sadd.s32 %s273, %s274
        %s276 = smul.addr %s275, 4
        %s277 = scalar_lea.vmem %s0, %s276
      $region48: #{glore_unit_forward.3} parent=43 // pred_fallthru
        _
    $region44: #{glore_unit_forward.3} parent=5 // pred_fallthru
      _
    %p278 = scmp.le.s32.totalorder 1, %s14
    %p279 = scmp.lt.s32.totalorder %s14, 5
    %p280 = pnand %p278, %p279
    %p281 = pneg %p280
    // Predicated region
    $region49: #{glore_unit_forward.3} parent=5 // pred_check
      _
    $region50: #{glore_unit_forward.3} parent=5 // pred_check_branch
      %283 = sbr.rel (%p280) target = $region52
    $region51: #{glore_unit_forward.3} parent=5 // pred_region
      %s284 = ssub.s32 %s14, 1
      %p285 = scmp.lt.s32.totalorder %s23, 1
      %s286 = scalar_select %p285, %s23, 1
      %p287 = scmp.lt.s32.totalorder %s24, 1
      %s288 = scalar_select %p287, %s24, 1
      %s289 = smul.addr %s286, 2
      %s290 = sadd.s32 %s288, %s289
      %s291 = smul.addr %s290, 4
      %s292 = scalar_lea.vmem %s0, %s291
      %p293 = pneg %p54
      %p294 = pneg %p51
      %p295 = pneg %p75
      %p296 = pneg %p72
      %p297 = pneg %p96
      %p298 = pneg %p93
      %p299 = pneg %p117
      %p300 = pneg %p114
      %p301 = pneg %p138
      %p302 = pneg %p135
      %p303 = pneg %p159
      %p304 = pneg %p156
      %p305 = pneg %p180
      %p306 = pneg %p177
      %p307 = pneg %p201
      %p308 = pneg %p198
      %p309 = pneg %p227
      %p310 = pneg %p224
      %p311 = scmp.lt.s32.totalorder %s23, 1
      %s312 = scalar_select %p311, %s23, 1
      %s313 = smul.addr %s312, 8
      %s314 = scalar_lea.vmem %s8, %s313
      %p315 = scmp.lt.s32.totalorder %s23, 1
      %s316 = scalar_select %p315, %s23, 1
      %p317 = scmp.lt.s32.totalorder %s24, 1
      %s318 = scalar_select %p317, %s24, 1
      %s319 = smul.addr %s316, 2
      %s320 = sadd.s32 %s318, %s319
      %s321 = smul.addr %s320, 4
      %s322 = scalar_lea.vmem %s0, %s321
      %p323 = scmp.lt.s32.totalorder %s23, 1
      %s324 = scalar_select %p323, %s23, 1
      %s325 = smul.addr %s324, 8
      %s326 = scalar_lea.vmem %s8, %s325
      %p327 = scmp.eq.s32.totalorder %s24, 0
      // Predicated region
      $region53: #{glore_unit_forward.3} parent=51 // pred_check
        %p328 = pneg %p327
      $region54: #{glore_unit_forward.3} parent=51 // pred_check_branch
        %330 = sbr.rel (%p328) target = $region56
      $region55: #{glore_unit_forward.3} parent=51 // pred_region
        %vm331 = vcmask 31744
        %332 = vst.msk [vmem:[#allocation2] sm:$0xff] %vm331, 0.0
      $region56: #{glore_unit_forward.3} parent=51 // pred_fallthru
        _
      %v333 = vld [vmem:[%s322] sm:$0xf]
      %v334 = vld [vmem:[%s1] sm:$0xff]
      %v335 = vld [vmem:[%s2] sm:$0xff]
      %337 = vset.pattern.permute.xlu0 0
      %338 = vperm.xlu0 %337, %v335
      %v339 = vpop.permute.xlu0 %338
      %vm341 = vcmask 31744
      %v343 = vsel %vm341, %v334, 0
      %vm345 = vcmask 1043456
      %v347 = vsel %vm345, %v333, 0
      %349 = vmatpush.msra.mxu0 0.0
      %350 = vmatpush.msra.mxu0 0.0
      %351 = vmatpush.msra.mxu0 0.0
      %352 = vmatpush.msra.mxu0 0.0
      %353 = vmatpush.msra.mxu0 0.0
      %354 = vmatpush.msra.mxu0 0.0
      %355 = vmatpush.msra.mxu0 0.0
      %356 = vmatpush.msra.mxu0 0.0
      %357 = vmatpush.msra.mxu0 0.0
      %358 = vmatpush.msra.mxu0 0.0
      %359 = vmatpush.msra.mxu0 0.0
      %360 = vmatpush.msra.mxu0 0.0
      %361 = vmatpush.msra.mxu0 0.0
      %362 = vmatpush.msra.mxu0 0.0
      %363 = vmatpush.msra.mxu0 0.0
      %364 = vmatpush.msra.mxu0 %v347
      %365 = vmatmul.f32.gmra.mxu0 %v343
      %v366 = vpop.f32.mrf.mxu0
      %v367 = vadd.f32 %v339, %v366
      %368 = vdwg.mxu0
      %v369 = vld [vmem:[%s3] sm:$0xf]
      %v370 = vld [vmem:[%s4] sm:$0xf]
      %372 = vset.pattern.permute.xlu0 0
      %373 = vperm.xlu0 %372, %v370
      %v374 = vpop.permute.xlu0 %373
      %v377 = vsel %vm341, %v369, 0
      %379 = vmatpush.msra.mxu0 0.0
      %380 = vmatpush.msra.mxu0 0.0
      %381 = vmatpush.msra.mxu0 0.0
      %382 = vmatpush.msra.mxu0 0.0
      %383 = vmatpush.msra.mxu0 0.0
      %384 = vmatpush.msra.mxu0 0.0
      %385 = vmatpush.msra.mxu0 0.0
      %386 = vmatpush.msra.mxu0 0.0
      %387 = vmatpush.msra.mxu0 0.0
      %388 = vmatpush.msra.mxu0 0.0
      %389 = vmatpush.msra.mxu0 0.0
      %390 = vmatpush.msra.mxu0 0.0
      %391 = vmatpush.msra.mxu0 0.0
      %392 = vmatpush.msra.mxu0 0.0
      %393 = vmatpush.msra.mxu0 0.0
      %394 = vmatpush.msra.mxu0 %v347
      %395 = vmatmul.f32.gmra.mxu0 %v377
      %v396 = vpop.f32.mrf.mxu0
      %v397 = vadd.f32 %v374, %v396
      %398 = vdwg.mxu0
      %v399 = vld [vmem:[#allocation2] sm:$0xff]
      %400 = vmatpush.xpose.msra.mxu0 0.0
      %401 = vmatpush.xpose.msra.mxu0 0.0
      %402 = vmatpush.xpose.msra.mxu0 0.0
      %403 = vmatpush.xpose.msra.mxu0 0.0
      %404 = vmatpush.xpose.msra.mxu0 0.0
      %405 = vmatpush.xpose.msra.mxu0 0.0
      %406 = vmatpush.xpose.msra.mxu0 0.0
      %407 = vmatpush.xpose.msra.mxu0 0.0
      %408 = vmatpush.xpose.msra.mxu0 0.0
      %409 = vmatpush.xpose.msra.mxu0 0.0
      %410 = vmatpush.xpose.msra.mxu0 0.0
      %411 = vmatpush.xpose.msra.mxu0 0.0
      %412 = vmatpush.xpose.msra.mxu0 0.0
      %413 = vmatpush.xpose.msra.mxu0 0.0
      %414 = vmatpush.xpose.msra.mxu0 0.0
      %415 = vmatpush.xpose.msra.mxu0 %v397
      %416 = vmatmul.f32.gmra.mxu0 %v367
      %v417 = vpop.f32.mrf.mxu0
      %v418 = vadd.f32 0.0, %v417
      %419 = vdwg.mxu0
      %v420 = vadd.f32 %v399, %v418
      %421 = vst.msk [vmem:[#allocation2] sm:$0xff] %vm341, %v420
      %p422 = scmp.eq.s32.totalorder %s24, 1
      // Predicated region
      $region57: #{glore_unit_forward.3} parent=51 // pred_check
        %p423 = pneg %p422
      $region58: #{glore_unit_forward.3} parent=51 // pred_check_branch
        %425 = sbr.rel (%p423) target = $region60
      $region59: #{glore_unit_forward.3} parent=51 // pred_region
        %v426 = vld [vmem:[#allocation2] sm:$0xff]
        %v427 = vld [vmem:[%s5] sm:$0xf]
        %v428 = vld [vmem:[%s6] sm:$0x1]
        %v430 = vperm.slane %v428, 0
        %v433 = vsel %vm341, %v426, 0
        %v436 = vsel %vm341, %v427, 0
        %438 = vmatpush.xpose.msra.mxu0 0.0
        %439 = vmatpush.xpose.msra.mxu0 0.0
        %440 = vmatpush.xpose.msra.mxu0 0.0
        %441 = vmatpush.xpose.msra.mxu0 0.0
        %442 = vmatpush.xpose.msra.mxu0 0.0
        %443 = vmatpush.xpose.msra.mxu0 0.0
        %444 = vmatpush.xpose.msra.mxu0 0.0
        %445 = vmatpush.xpose.msra.mxu0 0.0
        %446 = vmatpush.xpose.msra.mxu0 0.0
        %447 = vmatpush.xpose.msra.mxu0 0.0
        %448 = vmatpush.xpose.msra.mxu0 0.0
        %449 = vmatpush.xpose.msra.mxu0 0.0
        %450 = vmatpush.xpose.msra.mxu0 0.0
        %451 = vmatpush.xpose.msra.mxu0 0.0
        %452 = vmatpush.xpose.msra.mxu0 0.0
        %453 = vmatpush.xpose.msra.mxu0 %v436
        %454 = vmatmul.f32.gmra.mxu0 %v433
        %v455 = vpop.f32.mrf.mxu0
        %v456 = vadd.f32 %v430, %v455
        %457 = vdwg.mxu0
        %v458 = vadd.f32 %v456, %v426
        %v459 = vmax.f32 %v458, 0.0
        %v460 = vld [vmem:[%s7] sm:$0xff]
        %vm461 = vcmask 64512
        %v463 = vsel %vm461, %v460, 0
        %465 = vmatpush.msra.mxu0 0.0
        %466 = vmatpush.msra.mxu0 0.0
        %467 = vmatpush.msra.mxu0 0.0
        %468 = vmatpush.msra.mxu0 0.0
        %469 = vmatpush.msra.mxu0 0.0
        %470 = vmatpush.msra.mxu0 0.0
        %471 = vmatpush.msra.mxu0 0.0
        %472 = vmatpush.msra.mxu0 0.0
        %473 = vmatpush.msra.mxu0 0.0
        %474 = vmatpush.msra.mxu0 0.0
        %475 = vmatpush.msra.mxu0 0.0
        %476 = vmatpush.msra.mxu0 0.0
        %477 = vmatpush.msra.mxu0 0.0
        %478 = vmatpush.msra.mxu0 0.0
        %479 = vmatpush.msra.mxu0 0.0
        %480 = vmatpush.msra.mxu0 %v459
        %481 = vmatmul.f32.gmra.mxu0 %v463
        %v482 = vpop.f32.mrf.mxu0
        %v483 = vadd.f32 0.0, %v482
        %484 = vdwg.mxu0
        %485 = vst.msk [vmem:[%s326] sm:$0xff] %vm341, %v483
      $region60: #{glore_unit_forward.3} parent=51 // pred_fallthru
        _
      %p486 = scmp.lt.s32.totalorder %s23, 1
      %s487 = scalar_select %p486, %s23, 1
      %s488 = smul.addr %s487, 8
      %s489 = scalar_lea.vmem %s8, %s488
      // Predicated region
      $region61: #{glore_unit_forward.3} parent=51 // pred_check
        %p490 = pneg %p224
      $region62: #{glore_unit_forward.3} parent=51 // pred_check_branch
        %492 = sbr.rel (%p490) target = $region64
      $region63: #{glore_unit_forward.3} parent=51 // pred_region
        _
      $region64: #{glore_unit_forward.3} parent=51 // pred_fallthru
        _
    $region52: #{glore_unit_forward.3} parent=5 // pred_fallthru
      _
    %p493 = scmp.le.s32.totalorder 2, %s14
    // Predicated region
    $region65: #{glore_unit_forward.3} parent=5 // pred_check
      %p494 = pneg %p493
    $region66: #{glore_unit_forward.3} parent=5 // pred_check_branch
      %496 = sbr.rel (%p494) target = $region68
    $region67: #{glore_unit_forward.3} parent=5 // pred_region
      %s497 = ssub.s32 %s14, 2
      // Predicated region
      $region69: #{glore_unit_forward.3} parent=67 // pred_check
        %p498 = pneg %p230
      $region70: #{glore_unit_forward.3} parent=67 // pred_check_branch
        %500 = sbr.rel (%p498) target = $region72
      $region71: #{glore_unit_forward.3} parent=67 // pred_region
        %p501 = scmp.lt.s32.totalorder %s25, 1
        %s502 = scalar_select %p501, %s25, 1
        %s503 = smul.addr %s502, 8
        %s504 = scalar_lea.vmem %s8, %s503
      $region72: #{glore_unit_forward.3} parent=67 // pred_fallthru
        _
    $region68: #{glore_unit_forward.3} parent=5 // pred_fallthru
      _
  $region6: #{glore_unit_forward.3} parent=0 // loop_footer
    %s18 = sadd.s32 1, %s14
  $region7: #{glore_unit_forward.3} parent=0 // loop_footer_branch
    %13 = sbr.rel target = $region3
  $region8: #{glore_unit_forward.3} parent=0 // loop_exit
    _

// kernel: glore_unit_forward.5
$region0: #{glore_unit_forward.5}
  #allocation0 [shape = 'u32[]', space=smem, size = 0x4, offset = 0x4, fixed_abs, tag = 'smem constant byte address 0x4 - core index']
  #allocation1 [shape = 'u32[72,128]{1,0:T(1,128)}', space=vmem, size = 0x9000, scoped, tag = 'internal scratch']
  %s0 = inlined_call_operand.vmem [shape: f32[2,4,256], index: 0, kind: input, shape index: {}]
  %s1 = inlined_call_operand.vmem [shape: f32[2,4,256], index: 1, kind: input, shape index: {}, may-alias: {1,4}]
  %s2 = inlined_call_operand.vmem [shape: f32[1,4,1], index: 2, kind: input, shape index: {}]
  %s3 = inlined_call_operand.vmem [shape: f32[1,4,1], index: 3, kind: input, shape index: {}]
  %s4 = inlined_call_operand.vmem [shape: f32[2,4,256], index: 4, kind: output, shape index: {}, may-alias: {1,4}]
  %s5 = sld [smem:[#allocation0]]
  $region49: #{glore_unit_forward.5} parent=0
    _
  %s7 = ssub.s32 1, %s5
  %s8 = scalar_select 0, %s7, %s5
  loop: start=0, step=1, limit=6
  $region2: #{glore_unit_forward.5} parent=0 // loop_pre_header
    _
  $region3: #{glore_unit_forward.5} parent=0 // loop_header
    %s10 = sphi 0, %s14
    %p11 = scmp.ge.s32.totalorder %s10, 6
    %s17 = sphi 0, %s29
    %s18 = sphi 0, %s25
    %s19 = sphi 0, %s17
    %s20 = sphi 0, %s18
    %s21 = sphi 0, %s19
    %s22 = sphi 0, %s20
    %s34 = sphi 0, %s36
    %s37 = sphi 0, %s34
    %s38 = sphi 0, %s37
    %s54 = sphi 0, %s38
    %s62 = sphi 0, %s64
    %s65 = sphi 0, %s62
    %s66 = sphi 0, %s65
    %s82 = sphi 0, %s66
    %s86 = sphi 0, %s86
    %s88 = sphi 0, %s86
    %s89 = sphi 0, %s88
    %s103 = sphi 0, %s89
    %s107 = sphi 0, %s107
    %s109 = sphi 0, %s107
    %s110 = sphi 0, %s109
    %s124 = sphi 0, %s110
    %s132 = sphi 0, %s134
    %s135 = sphi 0, %s132
    %s136 = sphi 0, %s135
    %s152 = sphi 0, %s136
  $region4: #{glore_unit_forward.5} parent=0 // loop_header_branch
    %13 = sbr.rel (%p11) target = $region8
  $region5: #{glore_unit_forward.5} parent=0 // loop_body
    %s15 = ssub.s32 %s10, 1
    %s16 = ssub.s32 %s10, 2
    %s23 = sadd.s32 1, %s18
    %p24 = scmp.ge.s32.totalorder %s23, 2
    %s25 = scalar_select %p24, 0, %s23
    %s26 = sadd.s32 1, %s17
    %s27 = scalar_select %p24, %s26, %s17
    %p28 = scmp.ge.s32.totalorder %s27, 2
    %s29 = scalar_select %p28, 0, %s27
    %s30 = ssub.s32 %s17, %s29
    %s31 = ssub.s32 %s18, %s25
    %s32 = sor.u32 %s30, %s31
    %p33 = scmp.eq.s32.totalorder %s32, 0
    %s35 = sadd.s32 %s34, 1
    %s36 = scalar_select %p33, %s34, %s35
    %p39 = pneg %p33
    %p40 = scmp.eq.s32.totalorder %s10, 3
    %p41 = por %p39, %p40
    %p42 = scmp.ne.s32.totalorder %s34, %s37
    %p43 = scmp.eq.s32.totalorder %s10, 0
    %p44 = por %p42, %p43
    %p45 = scmp.ne.s32.totalorder %s34, %s37
    %p46 = scmp.eq.s32.totalorder %s15, 3
    %p47 = por %p45, %p46
    %p48 = scmp.ne.s32.totalorder %s37, %s38
    %p49 = scmp.eq.s32.totalorder %s15, 0
    %p50 = por %p48, %p49
    %p51 = scmp.ne.s32.totalorder %s37, %s38
    %p52 = scmp.eq.s32.totalorder %s16, 3
    %p53 = por %p51, %p52
    %p55 = scmp.ne.s32.totalorder %s38, %s54
    %p56 = scmp.eq.s32.totalorder %s16, 0
    %p57 = por %p55, %p56
    %s58 = ssub.s32 %s17, %s29
    %s59 = ssub.s32 %s18, %s25
    %s60 = sor.u32 %s58, %s59
    %p61 = scmp.eq.s32.totalorder %s60, 0
    %s63 = sadd.s32 %s62, 1
    %s64 = scalar_select %p61, %s62, %s63
    %p67 = pneg %p61
    %p68 = scmp.eq.s32.totalorder %s10, 3
    %p69 = por %p67, %p68
    %p70 = scmp.ne.s32.totalorder %s62, %s65
    %p71 = scmp.eq.s32.totalorder %s10, 0
    %p72 = por %p70, %p71
    %p73 = scmp.ne.s32.totalorder %s62, %s65
    %p74 = scmp.eq.s32.totalorder %s15, 3
    %p75 = por %p73, %p74
    %p76 = scmp.ne.s32.totalorder %s65, %s66
    %p77 = scmp.eq.s32.totalorder %s15, 0
    %p78 = por %p76, %p77
    %p79 = scmp.ne.s32.totalorder %s65, %s66
    %p80 = scmp.eq.s32.totalorder %s16, 3
    %p81 = por %p79, %p80
    %p83 = scmp.ne.s32.totalorder %s66, %s82
    %p84 = scmp.eq.s32.totalorder %s16, 0
    %p85 = por %p83, %p84
    %s87 = sadd.s32 %s86, 1
    %p90 = scmp.eq.s32.totalorder %s10, 3
    %p91 = scmp.ne.s32.totalorder %s86, %s88
    %p92 = scmp.eq.s32.totalorder %s10, 0
    %p93 = por %p91, %p92
    %p94 = scmp.ne.s32.totalorder %s86, %s88
    %p95 = scmp.eq.s32.totalorder %s15, 3
    %p96 = por %p94, %p95
    %p97 = scmp.ne.s32.totalorder %s88, %s89
    %p98 = scmp.eq.s32.totalorder %s15, 0
    %p99 = por %p97, %p98
    %p100 = scmp.ne.s32.totalorder %s88, %s89
    %p101 = scmp.eq.s32.totalorder %s16, 3
    %p102 = por %p100, %p101
    %p104 = scmp.ne.s32.totalorder %s89, %s103
    %p105 = scmp.eq.s32.totalorder %s16, 0
    %p106 = por %p104, %p105
    %s108 = sadd.s32 %s107, 1
    %p111 = scmp.eq.s32.totalorder %s10, 3
    %p112 = scmp.ne.s32.totalorder %s107, %s109
    %p113 = scmp.eq.s32.totalorder %s10, 0
    %p114 = por %p112, %p113
    %p115 = scmp.ne.s32.totalorder %s107, %s109
    %p116 = scmp.eq.s32.totalorder %s15, 3
    %p117 = por %p115, %p116
    %p118 = scmp.ne.s32.totalorder %s109, %s110
    %p119 = scmp.eq.s32.totalorder %s15, 0
    %p120 = por %p118, %p119
    %p121 = scmp.ne.s32.totalorder %s109, %s110
    %p122 = scmp.eq.s32.totalorder %s16, 3
    %p123 = por %p121, %p122
    %p125 = scmp.ne.s32.totalorder %s110, %s124
    %p126 = scmp.eq.s32.totalorder %s16, 0
    %p127 = por %p125, %p126
    %s128 = ssub.s32 %s17, %s29
    %s129 = ssub.s32 %s18, %s25
    %s130 = sor.u32 %s128, %s129
    %p131 = scmp.eq.s32.totalorder %s130, 0
    %s133 = sadd.s32 %s132, 1
    %s134 = scalar_select %p131, %s132, %s133
    %p137 = pneg %p131
    %p138 = scmp.eq.s32.totalorder %s10, 3
    %p139 = por %p137, %p138
    %p140 = scmp.ne.s32.totalorder %s132, %s135
    %p141 = scmp.eq.s32.totalorder %s10, 0
    %p142 = por %p140, %p141
    %p143 = scmp.ne.s32.totalorder %s132, %s135
    %p144 = scmp.eq.s32.totalorder %s15, 3
    %p145 = por %p143, %p144
    %p146 = scmp.ne.s32.totalorder %s135, %s136
    %p147 = scmp.eq.s32.totalorder %s15, 0
    %p148 = por %p146, %p147
    %p149 = scmp.ne.s32.totalorder %s135, %s136
    %p150 = scmp.eq.s32.totalorder %s16, 3
    %p151 = por %p149, %p150
    %p153 = scmp.ne.s32.totalorder %s136, %s152
    %p154 = scmp.eq.s32.totalorder %s16, 0
    %p155 = por %p153, %p154
    %p156 = scmp.le.s32.totalorder 1, %s10
    %p157 = scmp.lt.s32.totalorder %s10, 5
    %p158 = pnand %p156, %p157
    %p159 = pneg %p158
    // Predicated region
    $region9: #{glore_unit_forward.5} parent=5 // pred_check
      _
    $region10: #{glore_unit_forward.5} parent=5 // pred_check_branch
      %161 = sbr.rel (%p158) target = $region12
    $region11: #{glore_unit_forward.5} parent=5 // pred_region
      %s162 = ssub.s32 %s10, 1
      // Predicated region
      $region13: #{glore_unit_forward.5} parent=11 // pred_check
        %p163 = pneg %p99
      $region14: #{glore_unit_forward.5} parent=11 // pred_check_branch
        %165 = sbr.rel (%p163) target = $region16
      $region15: #{glore_unit_forward.5} parent=11 // pred_region
        _
      $region16: #{glore_unit_forward.5} parent=11 // pred_fallthru
        _
      // Predicated region
      $region17: #{glore_unit_forward.5} parent=11 // pred_check
        %p166 = pneg %p120
      $region18: #{glore_unit_forward.5} parent=11 // pred_check_branch
        %168 = sbr.rel (%p166) target = $region20
      $region19: #{glore_unit_forward.5} parent=11 // pred_region
        _
      $region20: #{glore_unit_forward.5} parent=11 // pred_fallthru
        _
    $region12: #{glore_unit_forward.5} parent=5 // pred_fallthru
      _
    %p169 = scmp.lt.s32.totalorder %s10, 4
    // Predicated region
    $region21: #{glore_unit_forward.5} parent=5 // pred_check
      %p170 = pneg %p169
    $region22: #{glore_unit_forward.5} parent=5 // pred_check_branch
      %172 = sbr.rel (%p170) target = $region24
    $region23: #{glore_unit_forward.5} parent=5 // pred_region
      // Predicated region
      $region25: #{glore_unit_forward.5} parent=23 // pred_check
        %p173 = pneg %p44
      $region26: #{glore_unit_forward.5} parent=23 // pred_check_branch
        %175 = sbr.rel (%p173) target = $region28
      $region27: #{glore_unit_forward.5} parent=23 // pred_region
        %p176 = scmp.lt.s32.totalorder %s17, 1
        %s177 = scalar_select %p176, %s17, 1
        %p178 = scmp.lt.s32.totalorder %s18, 1
        %s179 = scalar_select %p178, %s18, 1
        %s180 = smul.addr %s177, 2
        %s181 = sadd.s32 %s179, %s180
        %s182 = smul.addr %s181, 4
        %s183 = scalar_lea.vmem %s0, %s182
      $region28: #{glore_unit_forward.5} parent=23 // pred_fallthru
        _
      // Predicated region
      $region29: #{glore_unit_forward.5} parent=23 // pred_check
        %p184 = pneg %p72
      $region30: #{glore_unit_forward.5} parent=23 // pred_check_branch
        %186 = sbr.rel (%p184) target = $region32
      $region31: #{glore_unit_forward.5} parent=23 // pred_region
        %p187 = scmp.lt.s32.totalorder %s17, 1
        %s188 = scalar_select %p187, %s17, 1
        %p189 = scmp.lt.s32.totalorder %s18, 1
        %s190 = scalar_select %p189, %s18, 1
        %s191 = smul.addr %s188, 2
        %s192 = sadd.s32 %s190, %s191
        %s193 = smul.addr %s192, 4
        %s194 = scalar_lea.vmem %s1, %s193
      $region32: #{glore_unit_forward.5} parent=23 // pred_fallthru
        _
    $region24: #{glore_unit_forward.5} parent=5 // pred_fallthru
      _
    %p195 = scmp.le.s32.totalorder 1, %s10
    %p196 = scmp.lt.s32.totalorder %s10, 5
    %p197 = pnand %p195, %p196
    %p198 = pneg %p197
    // Predicated region
    $region33: #{glore_unit_forward.5} parent=5 // pred_check
      _
    $region34: #{glore_unit_forward.5} parent=5 // pred_check_branch
      %200 = sbr.rel (%p197) target = $region36
    $region35: #{glore_unit_forward.5} parent=5 // pred_region
      %s201 = ssub.s32 %s10, 1
      %p202 = scmp.lt.s32.totalorder %s19, 1
      %s203 = scalar_select %p202, %s19, 1
      %p204 = scmp.lt.s32.totalorder %s20, 1
      %s205 = scalar_select %p204, %s20, 1
      %s206 = smul.addr %s203, 2
      %s207 = sadd.s32 %s205, %s206
      %s208 = smul.addr %s207, 4
      %s209 = scalar_lea.vmem %s0, %s208
      %p210 = pneg %p50
      %p211 = pneg %p47
      %p212 = scmp.lt.s32.totalorder %s19, 1
      %s213 = scalar_select %p212, %s19, 1
      %p214 = scmp.lt.s32.totalorder %s20, 1
      %s215 = scalar_select %p214, %s20, 1
      %s216 = smul.addr %s213, 2
      %s217 = sadd.s32 %s215, %s216
      %s218 = smul.addr %s217, 4
      %s219 = scalar_lea.vmem %s1, %s218
      %p220 = pneg %p78
      %p221 = pneg %p75
      %p222 = pneg %p99
      %p223 = pneg %p96
      %p224 = pneg %p120
      %p225 = pneg %p117
      %p226 = pneg %p148
      %p227 = pneg %p145
      %p228 = scmp.lt.s32.totalorder %s19, 1
      %s229 = scalar_select %p228, %s19, 1
      %p230 = scmp.lt.s32.totalorder %s20, 1
      %s231 = scalar_select %p230, %s20, 1
      %s232 = smul.addr %s229, 2
      %s233 = sadd.s32 %s231, %s232
      %s234 = smul.addr %s233, 4
      %s235 = scalar_lea.vmem %s4, %s234
      %p236 = scmp.lt.s32.totalorder %s19, 1
      %s237 = scalar_select %p236, %s19, 1
      %p238 = scmp.lt.s32.totalorder %s20, 1
      %s239 = scalar_select %p238, %s20, 1
      %s240 = smul.addr %s237, 2
      %s241 = sadd.s32 %s239, %s240
      %s242 = smul.addr %s241, 4
      %s243 = scalar_lea.vmem %s0, %s242
      %p244 = scmp.lt.s32.totalorder %s19, 1
      %s245 = scalar_select %p244, %s19, 1
      %p246 = scmp.lt.s32.totalorder %s20, 1
      %s247 = scalar_select %p246, %s20, 1
      %s248 = smul.addr %s245, 2
      %s249 = sadd.s32 %s247, %s248
      %s250 = smul.addr %s249, 4
      %s251 = scalar_lea.vmem %s1, %s250
      %p252 = scmp.lt.s32.totalorder %s19, 1
      %s253 = scalar_select %p252, %s19, 1
      %p254 = scmp.lt.s32.totalorder %s20, 1
      %s255 = scalar_select %p254, %s20, 1
      %s256 = smul.addr %s253, 2
      %s257 = sadd.s32 %s255, %s256
      %s258 = smul.addr %s257, 4
      %s259 = scalar_lea.vmem %s4, %s258
      %v260 = vld [vmem:[%s243] sm:$0xf]
      %v261 = vld [vmem:[%s251] sm:$0xf]
      %v262 = vld [vmem:[%s2] sm:$0xf]
      %264 = vset.pattern.permute.xlu0 0
      %265 = vperm.xlu0 %264, %v262
      %v266 = vpop.permute.xlu0 %265
      %v268 = vmul.f32 %v261, %v266
      %v269 = vadd.f32 %v260, %v268
      %v270 = vld [vmem:[%s3] sm:$0xf]
      %272 = vset.pattern.permute.xlu0 0
      %273 = vperm.xlu0 %272, %v270
      %v274 = vpop.permute.xlu0 %273
      %v276 = vadd.f32 %v269, %v274
      %277 = vst [vmem:[%s259] sm:$0xf] %v276
      %p278 = scmp.lt.s32.totalorder %s19, 1
      %s279 = scalar_select %p278, %s19, 1
      %p280 = scmp.lt.s32.totalorder %s20, 1
      %s281 = scalar_select %p280, %s20, 1
      %s282 = smul.addr %s279, 2
      %s283 = sadd.s32 %s281, %s282
      %s284 = smul.addr %s283, 4
      %s285 = scalar_lea.vmem %s4, %s284
      // Predicated region
      $region37: #{glore_unit_forward.5} parent=35 // pred_check
        %p286 = pneg %p145
      $region38: #{glore_unit_forward.5} parent=35 // pred_check_branch
        %288 = sbr.rel (%p286) target = $region40
      $region39: #{glore_unit_forward.5} parent=35 // pred_region
        _
      $region40: #{glore_unit_forward.5} parent=35 // pred_fallthru
        _
    $region36: #{glore_unit_forward.5} parent=5 // pred_fallthru
      _
    %p289 = scmp.le.s32.totalorder 2, %s10
    // Predicated region
    $region41: #{glore_unit_forward.5} parent=5 // pred_check
      %p290 = pneg %p289
    $region42: #{glore_unit_forward.5} parent=5 // pred_check_branch
      %292 = sbr.rel (%p290) target = $region44
    $region43: #{glore_unit_forward.5} parent=5 // pred_region
      %s293 = ssub.s32 %s10, 2
      // Predicated region
      $region45: #{glore_unit_forward.5} parent=43 // pred_check
        %p294 = pneg %p151
      $region46: #{glore_unit_forward.5} parent=43 // pred_check_branch
        %296 = sbr.rel (%p294) target = $region48
      $region47: #{glore_unit_forward.5} parent=43 // pred_region
        %p297 = scmp.lt.s32.totalorder %s21, 1
        %s298 = scalar_select %p297, %s21, 1
        %p299 = scmp.lt.s32.totalorder %s22, 1
        %s300 = scalar_select %p299, %s22, 1
        %s301 = smul.addr %s298, 2
        %s302 = sadd.s32 %s300, %s301
        %s303 = smul.addr %s302, 4
        %s304 = scalar_lea.vmem %s4, %s303
      $region48: #{glore_unit_forward.5} parent=43 // pred_fallthru
        _
    $region44: #{glore_unit_forward.5} parent=5 // pred_fallthru
      _
  $region6: #{glore_unit_forward.5} parent=0 // loop_footer
    %s14 = sadd.s32 1, %s10
  $region7: #{glore_unit_forward.5} parent=0 // loop_footer_branch
    %9 = sbr.rel target = $region3
  $region8: #{glore_unit_forward.5} parent=0 // loop_exit
    _

// kernel: glore_unit_forward.4
$region0: #{glore_unit_forward.4}
  #allocation0 [shape = 'u32[]', space=smem, size = 0x4, offset = 0x4, fixed_abs, tag = 'smem constant byte address 0x4 - core index']
  #allocation1 [shape = 'u32[72,128]{1,0:T(1,128)}', space=vmem, size = 0x9000, scoped, tag = 'internal scratch']
  %s0 = inlined_call_operand.vmem [shape: f32[2,4,256], index: 0, kind: input, shape index: {}]
  %s1 = inlined_call_operand.vmem [shape: f32[2,8,4], index: 1, kind: input, shape index: {}]
  %s2 = inlined_call_operand.vmem [shape: f32[4,4], index: 2, kind: input, shape index: {}]
  %s3 = inlined_call_operand.vmem [shape: f32[4,1], index: 3, kind: input, shape index: {}]
  %s4 = inlined_call_operand.vmem [shape: f32[4,8], index: 4, kind: input, shape index: {}]
  %s5 = inlined_call_operand.vmem [shape: f32[2,4,256], index: 5, kind: output, shape index: {0}]
  %s6 = inlined_call_operand.vmem [shape: f32[2,4,1], index: 6, kind: output, shape index: {1}]
  %s7 = inlined_call_operand.vmem [shape: f32[2,4,1], index: 7, kind: output, shape index: {2}]
  %8 = xla_tuple %s5, %s6, %s7
  %s9 = sld [smem:[#allocation0]]
  $region73: #{glore_unit_forward.4} parent=0
    _
  %s11 = ssub.s32 1, %s9
  %s12 = scalar_select 0, %s11, %s9
  loop: start=0, step=1, limit=6
  $region2: #{glore_unit_forward.4} parent=0 // loop_pre_header
    _
  $region3: #{glore_unit_forward.4} parent=0 // loop_header
    %s14 = sphi 0, %s18
    %p15 = scmp.ge.s32.totalorder %s14, 6
    %s21 = sphi 0, %s33
    %s22 = sphi 0, %s29
    %s23 = sphi 0, %s21
    %s24 = sphi 0, %s22
    %s25 = sphi 0, %s23
    %s26 = sphi 0, %s24
    %s38 = sphi 0, %s40
    %s41 = sphi 0, %s38
    %s42 = sphi 0, %s41
    %s58 = sphi 0, %s42
    %s64 = sphi 0, %s66
    %s67 = sphi 0, %s64
    %s68 = sphi 0, %s67
    %s84 = sphi 0, %s68
    %s88 = sphi 0, %s88
    %s90 = sphi 0, %s88
    %s91 = sphi 0, %s90
    %s105 = sphi 0, %s91
    %s109 = sphi 0, %s109
    %s111 = sphi 0, %s109
    %s112 = sphi 0, %s111
    %s126 = sphi 0, %s112
    %s130 = sphi 0, %s130
    %s132 = sphi 0, %s130
    %s133 = sphi 0, %s132
    %s147 = sphi 0, %s133
    %s155 = sphi 0, %s157
    %s158 = sphi 0, %s155
    %s159 = sphi 0, %s158
    %s175 = sphi 0, %s159
    %s181 = sphi 0, %s183
    %s184 = sphi 0, %s181
    %s185 = sphi 0, %s184
    %s201 = sphi 0, %s185
    %s207 = sphi 0, %s209
    %s210 = sphi 0, %s207
    %s211 = sphi 0, %s210
    %s227 = sphi 0, %s211
  $region4: #{glore_unit_forward.4} parent=0 // loop_header_branch
    %17 = sbr.rel (%p15) target = $region8
  $region5: #{glore_unit_forward.4} parent=0 // loop_body
    %s19 = ssub.s32 %s14, 1
    %s20 = ssub.s32 %s14, 2
    %s27 = sadd.s32 1, %s22
    %p28 = scmp.ge.s32.totalorder %s27, 2
    %s29 = scalar_select %p28, 0, %s27
    %s30 = sadd.s32 1, %s21
    %s31 = scalar_select %p28, %s30, %s21
    %p32 = scmp.ge.s32.totalorder %s31, 2
    %s33 = scalar_select %p32, 0, %s31
    %s34 = ssub.s32 %s21, %s33
    %s35 = ssub.s32 %s22, %s29
    %s36 = sor.u32 %s34, %s35
    %p37 = scmp.eq.s32.totalorder %s36, 0
    %s39 = sadd.s32 %s38, 1
    %s40 = scalar_select %p37, %s38, %s39
    %p43 = pneg %p37
    %p44 = scmp.eq.s32.totalorder %s14, 3
    %p45 = por %p43, %p44
    %p46 = scmp.ne.s32.totalorder %s38, %s41
    %p47 = scmp.eq.s32.totalorder %s14, 0
    %p48 = por %p46, %p47
    %p49 = scmp.ne.s32.totalorder %s38, %s41
    %p50 = scmp.eq.s32.totalorder %s19, 3
    %p51 = por %p49, %p50
    %p52 = scmp.ne.s32.totalorder %s41, %s42
    %p53 = scmp.eq.s32.totalorder %s19, 0
    %p54 = por %p52, %p53
    %p55 = scmp.ne.s32.totalorder %s41, %s42
    %p56 = scmp.eq.s32.totalorder %s20, 3
    %p57 = por %p55, %p56
    %p59 = scmp.ne.s32.totalorder %s42, %s58
    %p60 = scmp.eq.s32.totalorder %s20, 0
    %p61 = por %p59, %p60
    %s62 = ssub.s32 %s21, %s33
    %p63 = scmp.eq.s32.totalorder %s62, 0
    %s65 = sadd.s32 %s64, 1
    %s66 = scalar_select %p63, %s64, %s65
    %p69 = pneg %p63
    %p70 = scmp.eq.s32.totalorder %s14, 3
    %p71 = por %p69, %p70
    %p72 = scmp.ne.s32.totalorder %s64, %s67
    %p73 = scmp.eq.s32.totalorder %s14, 0
    %p74 = por %p72, %p73
    %p75 = scmp.ne.s32.totalorder %s64, %s67
    %p76 = scmp.eq.s32.totalorder %s19, 3
    %p77 = por %p75, %p76
    %p78 = scmp.ne.s32.totalorder %s67, %s68
    %p79 = scmp.eq.s32.totalorder %s19, 0
    %p80 = por %p78, %p79
    %p81 = scmp.ne.s32.totalorder %s67, %s68
    %p82 = scmp.eq.s32.totalorder %s20, 3
    %p83 = por %p81, %p82
    %p85 = scmp.ne.s32.totalorder %s68, %s84
    %p86 = scmp.eq.s32.totalorder %s20, 0
    %p87 = por %p85, %p86
    %s89 = sadd.s32 %s88, 1
    %p92 = scmp.eq.s32.totalorder %s14, 3
    %p93 = scmp.ne.s32.totalorder %s88, %s90
    %p94 = scmp.eq.s32.totalorder %s14, 0
    %p95 = por %p93, %p94
    %p96 = scmp.ne.s32.totalorder %s88, %s90
    %p97 = scmp.eq.s32.totalorder %s19, 3
    %p98 = por %p96, %p97
    %p99 = scmp.ne.s32.totalorder %s90, %s91
    %p100 = scmp.eq.s32.totalorder %s19, 0
    %p101 = por %p99, %p100
    %p102 = scmp.ne.s32.totalorder %s90, %s91
    %p103 = scmp.eq.s32.totalorder %s20, 3
    %p104 = por %p102, %p103
    %p106 = scmp.ne.s32.totalorder %s91, %s105
    %p107 = scmp.eq.s32.totalorder %s20, 0
    %p108 = por %p106, %p107
    %s110 = sadd.s32 %s109, 1
    %p113 = scmp.eq.s32.totalorder %s14, 3
    %p114 = scmp.ne.s32.totalorder %s109, %s111
    %p115 = scmp.eq.s32.totalorder %s14, 0
    %p116 = por %p114, %p115
    %p117 = scmp.ne.s32.totalorder %s109, %s111
    %p118 = scmp.eq.s32.totalorder %s19, 3
    %p119 = por %p117, %p118
    %p120 = scmp.ne.s32.totalorder %s111, %s112
    %p121 = scmp.eq.s32.totalorder %s19, 0
    %p122 = por %p120, %p121
    %p123 = scmp.ne.s32.totalorder %s111, %s112
    %p124 = scmp.eq.s32.totalorder %s20, 3
    %p125 = por %p123, %p124
    %p127 = scmp.ne.s32.totalorder %s112, %s126
    %p128 = scmp.eq.s32.totalorder %s20, 0
    %p129 = por %p127, %p128
    %s131 = sadd.s32 %s130, 1
    %p134 = scmp.eq.s32.totalorder %s14, 3
    %p135 = scmp.ne.s32.totalorder %s130, %s132
    %p136 = scmp.eq.s32.totalorder %s14, 0
    %p137 = por %p135, %p136
    %p138 = scmp.ne.s32.totalorder %s130, %s132
    %p139 = scmp.eq.s32.totalorder %s19, 3
    %p140 = por %p138, %p139
    %p141 = scmp.ne.s32.totalorder %s132, %s133
    %p142 = scmp.eq.s32.totalorder %s19, 0
    %p143 = por %p141, %p142
    %p144 = scmp.ne.s32.totalorder %s132, %s133
    %p145 = scmp.eq.s32.totalorder %s20, 3
    %p146 = por %p144, %p145
    %p148 = scmp.ne.s32.totalorder %s133, %s147
    %p149 = scmp.eq.s32.totalorder %s20, 0
    %p150 = por %p148, %p149
    %s151 = ssub.s32 %s21, %s33
    %s152 = ssub.s32 %s22, %s29
    %s153 = sor.u32 %s151, %s152
    %p154 = scmp.eq.s32.totalorder %s153, 0
    %s156 = sadd.s32 %s155, 1
    %s157 = scalar_select %p154, %s155, %s156
    %p160 = pneg %p154
    %p161 = scmp.eq.s32.totalorder %s14, 3
    %p162 = por %p160, %p161
    %p163 = scmp.ne.s32.totalorder %s155, %s158
    %p164 = scmp.eq.s32.totalorder %s14, 0
    %p165 = por %p163, %p164
    %p166 = scmp.ne.s32.totalorder %s155, %s158
    %p167 = scmp.eq.s32.totalorder %s19, 3
    %p168 = por %p166, %p167
    %p169 = scmp.ne.s32.totalorder %s158, %s159
    %p170 = scmp.eq.s32.totalorder %s19, 0
    %p171 = por %p169, %p170
    %p172 = scmp.ne.s32.totalorder %s158, %s159
    %p173 = scmp.eq.s32.totalorder %s20, 3
    %p174 = por %p172, %p173
    %p176 = scmp.ne.s32.totalorder %s159, %s175
    %p177 = scmp.eq.s32.totalorder %s20, 0
    %p178 = por %p176, %p177
    %s179 = ssub.s32 %s21, %s33
    %p180 = scmp.eq.s32.totalorder %s179, 0
    %s182 = sadd.s32 %s181, 1
    %s183 = scalar_select %p180, %s181, %s182
    %p186 = pneg %p180
    %p187 = scmp.eq.s32.totalorder %s14, 3
    %p188 = por %p186, %p187
    %p189 = scmp.ne.s32.totalorder %s181, %s184
    %p190 = scmp.eq.s32.totalorder %s14, 0
    %p191 = por %p189, %p190
    %p192 = scmp.ne.s32.totalorder %s181, %s184
    %p193 = scmp.eq.s32.totalorder %s19, 3
    %p194 = por %p192, %p193
    %p195 = scmp.ne.s32.totalorder %s184, %s185
    %p196 = scmp.eq.s32.totalorder %s19, 0
    %p197 = por %p195, %p196
    %p198 = scmp.ne.s32.totalorder %s184, %s185
    %p199 = scmp.eq.s32.totalorder %s20, 3
    %p200 = por %p198, %p199
    %p202 = scmp.ne.s32.totalorder %s185, %s201
    %p203 = scmp.eq.s32.totalorder %s20, 0
    %p204 = por %p202, %p203
    %s205 = ssub.s32 %s21, %s33
    %p206 = scmp.eq.s32.totalorder %s205, 0
    %s208 = sadd.s32 %s207, 1
    %s209 = scalar_select %p206, %s207, %s208
    %p212 = pneg %p206
    %p213 = scmp.eq.s32.totalorder %s14, 3
    %p214 = por %p212, %p213
    %p215 = scmp.ne.s32.totalorder %s207, %s210
    %p216 = scmp.eq.s32.totalorder %s14, 0
    %p217 = por %p215, %p216
    %p218 = scmp.ne.s32.totalorder %s207, %s210
    %p219 = scmp.eq.s32.totalorder %s19, 3
    %p220 = por %p218, %p219
    %p221 = scmp.ne.s32.totalorder %s210, %s211
    %p222 = scmp.eq.s32.totalorder %s19, 0
    %p223 = por %p221, %p222
    %p224 = scmp.ne.s32.totalorder %s210, %s211
    %p225 = scmp.eq.s32.totalorder %s20, 3
    %p226 = por %p224, %p225
    %p228 = scmp.ne.s32.totalorder %s211, %s227
    %p229 = scmp.eq.s32.totalorder %s20, 0
    %p230 = por %p228, %p229
    %p231 = scmp.le.s32.totalorder 1, %s14
    %p232 = scmp.lt.s32.totalorder %s14, 5
    %p233 = pnand %p231, %p232
    %p234 = pneg %p233
    // Predicated region
    $region9: #{glore_unit_forward.4} parent=5 // pred_check
      _
    $region10: #{glore_unit_forward.4} parent=5 // pred_check_branch
      %236 = sbr.rel (%p233) target = $region12
    $region11: #{glore_unit_forward.4} parent=5 // pred_region
      %s237 = ssub.s32 %s14, 1
      // Predicated region
      $region13: #{glore_unit_forward.4} parent=11 // pred_check
        %p238 = pneg %p101
      $region14: #{glore_unit_forward.4} parent=11 // pred_check_branch
        %240 = sbr.rel (%p238) target = $region16
      $region15: #{glore_unit_forward.4} parent=11 // pred_region
        _
      $region16: #{glore_unit_forward.4} parent=11 // pred_fallthru
        _
      // Predicated region
      $region17: #{glore_unit_forward.4} parent=11 // pred_check
        %p241 = pneg %p122
      $region18: #{glore_unit_forward.4} parent=11 // pred_check_branch
        %243 = sbr.rel (%p241) target = $region20
      $region19: #{glore_unit_forward.4} parent=11 // pred_region
        _
      $region20: #{glore_unit_forward.4} parent=11 // pred_fallthru
        _
      // Predicated region
      $region21: #{glore_unit_forward.4} parent=11 // pred_check
        %p244 = pneg %p143
      $region22: #{glore_unit_forward.4} parent=11 // pred_check_branch
        %246 = sbr.rel (%p244) target = $region24
      $region23: #{glore_unit_forward.4} parent=11 // pred_region
        _
      $region24: #{glore_unit_forward.4} parent=11 // pred_fallthru
        _
    $region12: #{glore_unit_forward.4} parent=5 // pred_fallthru
      _
    %p247 = scmp.lt.s32.totalorder %s14, 4
    // Predicated region
    $region25: #{glore_unit_forward.4} parent=5 // pred_check
      %p248 = pneg %p247
    $region26: #{glore_unit_forward.4} parent=5 // pred_check_branch
      %250 = sbr.rel (%p248) target = $region28
    $region27: #{glore_unit_forward.4} parent=5 // pred_region
      // Predicated region
      $region29: #{glore_unit_forward.4} parent=27 // pred_check
        %p251 = pneg %p48
      $region30: #{glore_unit_forward.4} parent=27 // pred_check_branch
        %253 = sbr.rel (%p251) target = $region32
      $region31: #{glore_unit_forward.4} parent=27 // pred_region
        %p254 = scmp.lt.s32.totalorder %s21, 1
        %s255 = scalar_select %p254, %s21, 1
        %p256 = scmp.lt.s32.totalorder %s22, 1
        %s257 = scalar_select %p256, %s22, 1
        %s258 = smul.addr %s255, 2
        %s259 = sadd.s32 %s257, %s258
        %s260 = smul.addr %s259, 4
        %s261 = scalar_lea.vmem %s0, %s260
      $region32: #{glore_unit_forward.4} parent=27 // pred_fallthru
        _
      // Predicated region
      $region33: #{glore_unit_forward.4} parent=27 // pred_check
        %p262 = pneg %p74
      $region34: #{glore_unit_forward.4} parent=27 // pred_check_branch
        %264 = sbr.rel (%p262) target = $region36
      $region35: #{glore_unit_forward.4} parent=27 // pred_region
        %p265 = scmp.lt.s32.totalorder %s21, 1
        %s266 = scalar_select %p265, %s21, 1
        %s267 = smul.addr %s266, 8
        %s268 = scalar_lea.vmem %s1, %s267
      $region36: #{glore_unit_forward.4} parent=27 // pred_fallthru
        _
    $region28: #{glore_unit_forward.4} parent=5 // pred_fallthru
      _
    %p269 = scmp.le.s32.totalorder 1, %s14
    %p270 = scmp.lt.s32.totalorder %s14, 5
    %p271 = pnand %p269, %p270
    %p272 = pneg %p271
    // Predicated region
    $region37: #{glore_unit_forward.4} parent=5 // pred_check
      _
    $region38: #{glore_unit_forward.4} parent=5 // pred_check_branch
      %274 = sbr.rel (%p271) target = $region40
    $region39: #{glore_unit_forward.4} parent=5 // pred_region
      %s275 = ssub.s32 %s14, 1
      %p276 = scmp.lt.s32.totalorder %s23, 1
      %s277 = scalar_select %p276, %s23, 1
      %p278 = scmp.lt.s32.totalorder %s24, 1
      %s279 = scalar_select %p278, %s24, 1
      %s280 = smul.addr %s277, 2
      %s281 = sadd.s32 %s279, %s280
      %s282 = smul.addr %s281, 4
      %s283 = scalar_lea.vmem %s0, %s282
      %p284 = pneg %p54
      %p285 = pneg %p51
      %p286 = scmp.lt.s32.totalorder %s23, 1
      %s287 = scalar_select %p286, %s23, 1
      %s288 = smul.addr %s287, 8
      %s289 = scalar_lea.vmem %s1, %s288
      %p290 = pneg %p80
      %p291 = pneg %p77
      %p292 = pneg %p101
      %p293 = pneg %p98
      %p294 = pneg %p122
      %p295 = pneg %p119
      %p296 = pneg %p143
      %p297 = pneg %p140
      %p298 = pneg %p171
      %p299 = pneg %p168
      %p300 = scmp.lt.s32.totalorder %s23, 1
      %s301 = scalar_select %p300, %s23, 1
      %p302 = scmp.lt.s32.totalorder %s24, 1
      %s303 = scalar_select %p302, %s24, 1
      %s304 = smul.addr %s301, 2
      %s305 = sadd.s32 %s303, %s304
      %s306 = smul.addr %s305, 4
      %s307 = scalar_lea.vmem %s5, %s306
      %p308 = pneg %p197
      %p309 = pneg %p194
      %p310 = scmp.lt.s32.totalorder %s23, 1
      %s311 = scalar_select %p310, %s23, 1
      %s312 = smul.addr %s311, 4
      %s313 = scalar_lea.vmem %s6, %s312
      %p314 = pneg %p223
      %p315 = pneg %p220
      %p316 = scmp.lt.s32.totalorder %s23, 1
      %s317 = scalar_select %p316, %s23, 1
      %s318 = smul.addr %s317, 4
      %s319 = scalar_lea.vmem %s7, %s318
      %p320 = scmp.lt.s32.totalorder %s23, 1
      %s321 = scalar_select %p320, %s23, 1
      %p322 = scmp.lt.s32.totalorder %s24, 1
      %s323 = scalar_select %p322, %s24, 1
      %s324 = smul.addr %s321, 2
      %s325 = sadd.s32 %s323, %s324
      %s326 = smul.addr %s325, 4
      %s327 = scalar_lea.vmem %s0, %s326
      %p328 = scmp.lt.s32.totalorder %s23, 1
      %s329 = scalar_select %p328, %s23, 1
      %s330 = smul.addr %s329, 8
      %s331 = scalar_lea.vmem %s1, %s330
      %p332 = scmp.lt.s32.totalorder %s23, 1
      %s333 = scalar_select %p332, %s23, 1
      %p334 = scmp.lt.s32.totalorder %s24, 1
      %s335 = scalar_select %p334, %s24, 1
      %s336 = smul.addr %s333, 2
      %s337 = sadd.s32 %s335, %s336
      %s338 = smul.addr %s337, 4
      %s339 = scalar_lea.vmem %s5, %s338
      %p340 = scmp.lt.s32.totalorder %s23, 1
      %s341 = scalar_select %p340, %s23, 1
      %s342 = smul.addr %s341, 4
      %s343 = scalar_lea.vmem %s6, %s342
      %p344 = scmp.lt.s32.totalorder %s23, 1
      %s345 = scalar_select %p344, %s23, 1
      %s346 = smul.addr %s345, 4
      %s347 = scalar_lea.vmem %s7, %s346
      %p348 = scmp.eq.s32.totalorder %s24, 0
      // Predicated region
      $region41: #{glore_unit_forward.4} parent=39 // pred_check
        %p349 = pneg %p348
      $region42: #{glore_unit_forward.4} parent=39 // pred_check_branch
        %351 = sbr.rel (%p349) target = $region44
      $region43: #{glore_unit_forward.4} parent=39 // pred_region
        %vm352 = vcmask 3072
        %353 = vst.msk [vmem:[%s343] sm:$0xf] %vm352, 0.0
        %354 = vst.msk [vmem:[%s347] sm:$0xf] %vm352, 0.0
      $region44: #{glore_unit_forward.4} parent=39 // pred_fallthru
        _
      %v355 = vld [vmem:[%s327] sm:$0xf]
      %v356 = vld [vmem:[%s331] sm:$0xff]
      %v357 = vld [vmem:[%s2] sm:$0xf]
      %v358 = vld [vmem:[%s3] sm:$0xf]
      %360 = vset.pattern.permute.xlu0 0
      %361 = vperm.xlu0 %360, %v358
      %v362 = vpop.permute.xlu0 %361
      %vm364 = vcmask 31744
      %v366 = vsel %vm364, %v357, 0
      %vm368 = vcmask 1043456
      %v370 = vsel %vm368, %v355, 0
      %372 = vmatpush.msra.mxu0 0.0
      %373 = vmatpush.msra.mxu0 0.0
      %374 = vmatpush.msra.mxu0 0.0
      %375 = vmatpush.msra.mxu0 0.0
      %376 = vmatpush.msra.mxu0 0.0
      %377 = vmatpush.msra.mxu0 0.0
      %378 = vmatpush.msra.mxu0 0.0
      %379 = vmatpush.msra.mxu0 0.0
      %380 = vmatpush.msra.mxu0 0.0
      %381 = vmatpush.msra.mxu0 0.0
      %382 = vmatpush.msra.mxu0 0.0
      %383 = vmatpush.msra.mxu0 0.0
      %384 = vmatpush.msra.mxu0 0.0
      %385 = vmatpush.msra.mxu0 0.0
      %386 = vmatpush.msra.mxu0 0.0
      %387 = vmatpush.msra.mxu0 %v370
      %388 = vmatmul.f32.gmra.mxu0 %v366
      %v389 = vpop.f32.mrf.mxu0
      %v390 = vadd.f32 %v362, %v389
      %391 = vdwg.mxu0
      %v393 = vsel %vm364, %v356, 0
      %v396 = vsel %vm368, %v390, 0
      %398 = vmatpush.msra.mxu0 0.0
      %399 = vmatpush.msra.mxu0 0.0
      %400 = vmatpush.msra.mxu0 0.0
      %401 = vmatpush.msra.mxu0 0.0
      %402 = vmatpush.msra.mxu0 0.0
      %403 = vmatpush.msra.mxu0 0.0
      %404 = vmatpush.msra.mxu0 0.0
      %405 = vmatpush.msra.mxu0 0.0
      %406 = vmatpush.msra.mxu0 0.0
      %407 = vmatpush.msra.mxu0 0.0
      %408 = vmatpush.msra.mxu0 0.0
      %409 = vmatpush.msra.mxu0 0.0
      %410 = vmatpush.msra.mxu0 0.0
      %411 = vmatpush.msra.mxu0 0.0
      %412 = vmatpush.msra.mxu0 0.0
      %413 = vmatpush.msra.mxu0 %v396
      %414 = vmatmul.f32.gmra.mxu0 %v393
      %v415 = vpop.f32.mrf.mxu0
      %v416 = vadd.f32 0.0, %v415
      %417 = vdwg.mxu0
      %v418 = vld [vmem:[%s4] sm:$0xf]
      %vm419 = vcmask 64512
      %v421 = vsel %vm419, %v418, 0
      %423 = vmatpush.msra.mxu0 0.0
      %424 = vmatpush.msra.mxu0 0.0
      %425 = vmatpush.msra.mxu0 0.0
      %426 = vmatpush.msra.mxu0 0.0
      %427 = vmatpush.msra.mxu0 0.0
      %428 = vmatpush.msra.mxu0 0.0
      %429 = vmatpush.msra.mxu0 0.0
      %430 = vmatpush.msra.mxu0 0.0
      %431 = vmatpush.msra.mxu0 0.0
      %432 = vmatpush.msra.mxu0 0.0
      %433 = vmatpush.msra.mxu0 0.0
      %434 = vmatpush.msra.mxu0 0.0
      %435 = vmatpush.msra.mxu0 0.0
      %436 = vmatpush.msra.mxu0 0.0
      %437 = vmatpush.msra.mxu0 0.0
      %438 = vmatpush.msra.mxu0 %v416
      %439 = vmatmul.f32.gmra.mxu0 %v421
      %v440 = vpop.f32.mrf.mxu0
      %v441 = vadd.f32 0.0, %v440
      %442 = vdwg.mxu0
      %443 = vst [vmem:[%s339] sm:$0xf] %v441
      %v444 = vld [vmem:[%s343] sm:$0xf]
      %v445 = vsel %vm368, %v441, 0.0
      %446 = vadd.xlane.f32.xlu0 %v445
      %v447 = vpop.xlane.xlu0 %446
      %v448 = vadd.f32 %v444, %v447
      %vm449 = vcmask 3072
      %450 = vst.msk [vmem:[%s343] sm:$0xf] %vm449, %v448
      %v451 = vld [vmem:[%s347] sm:$0xf]
      %v452 = vmul.f32 %v441, %v441
      %v453 = vsel %vm368, %v452, 0.0
      %454 = vadd.xlane.f32.xlu0 %v453
      %v455 = vpop.xlane.xlu0 %454
      %v456 = vadd.f32 %v451, %v455
      %457 = vst.msk [vmem:[%s347] sm:$0xf] %vm449, %v456
      %p458 = scmp.lt.s32.totalorder %s23, 1
      %s459 = scalar_select %p458, %s23, 1
      %p460 = scmp.lt.s32.totalorder %s24, 1
      %s461 = scalar_select %p460, %s24, 1
      %s462 = smul.addr %s459, 2
      %s463 = sadd.s32 %s461, %s462
      %s464 = smul.addr %s463, 4
      %s465 = scalar_lea.vmem %s5, %s464
      %p466 = scmp.lt.s32.totalorder %s23, 1
      %s467 = scalar_select %p466, %s23, 1
      %s468 = smul.addr %s467, 4
      %s469 = scalar_lea.vmem %s6, %s468
      %p470 = scmp.lt.s32.totalorder %s23, 1
      %s471 = scalar_select %p470, %s23, 1
      %s472 = smul.addr %s471, 4
      %s473 = scalar_lea.vmem %s7, %s472
      // Predicated region
      $region45: #{glore_unit_forward.4} parent=39 // pred_check
        %p474 = pneg %p168
      $region46: #{glore_unit_forward.4} parent=39 // pred_check_branch
        %476 = sbr.rel (%p474) target = $region48
      $region47: #{glore_unit_forward.4} parent=39 // pred_region
        _
      $region48: #{glore_unit_forward.4} parent=39 // pred_fallthru
        _
      // Predicated region
      $region49: #{glore_unit_forward.4} parent=39 // pred_check
        %p477 = pneg %p194
      $region50: #{glore_unit_forward.4} parent=39 // pred_check_branch
        %479 = sbr.rel (%p477) target = $region52
      $region51: #{glore_unit_forward.4} parent=39 // pred_region
        _
      $region52: #{glore_unit_forward.4} parent=39 // pred_fallthru
        _
      // Predicated region
      $region53: #{glore_unit_forward.4} parent=39 // pred_check
        %p480 = pneg %p220
      $region54: #{glore_unit_forward.4} parent=39 // pred_check_branch
        %482 = sbr.rel (%p480) target = $region56
      $region55: #{glore_unit_forward.4} parent=39 // pred_region
        _
      $region56: #{glore_unit_forward.4} parent=39 // pred_fallthru
        _
    $region40: #{glore_unit_forward.4} parent=5 // pred_fallthru
      _
    %p483 = scmp.le.s32.totalorder 2, %s14
    // Predicated region
    $region57: #{glore_unit_forward.4} parent=5 // pred_check
      %p484 = pneg %p483
    $region58: #{glore_unit_forward.4} parent=5 // pred_check_branch
      %486 = sbr.rel (%p484) target = $region60
    $region59: #{glore_unit_forward.4} parent=5 // pred_region
      %s487 = ssub.s32 %s14, 2
      // Predicated region
      $region61: #{glore_unit_forward.4} parent=59 // pred_check
        %p488 = pneg %p174
      $region62: #{glore_unit_forward.4} parent=59 // pred_check_branch
        %490 = sbr.rel (%p488) target = $region64
      $region63: #{glore_unit_forward.4} parent=59 // pred_region
        %p491 = scmp.lt.s32.totalorder %s25, 1
        %s492 = scalar_select %p491, %s25, 1
        %p493 = scmp.lt.s32.totalorder %s26, 1
        %s494 = scalar_select %p493, %s26, 1
        %s495 = smul.addr %s492, 2
        %s496 = sadd.s32 %s494, %s495
        %s497 = smul.addr %s496, 4
        %s498 = scalar_lea.vmem %s5, %s497
      $region64: #{glore_unit_forward.4} parent=59 // pred_fallthru
        _
      // Predicated region
      $region65: #{glore_unit_forward.4} parent=59 // pred_check
        %p499 = pneg %p200
      $region66: #{glore_unit_forward.4} parent=59 // pred_check_branch
        %501 = sbr.rel (%p499) target = $region68
      $region67: #{glore_unit_forward.4} parent=59 // pred_region
        %p502 = scmp.lt.s32.totalorder %s25, 1
        %s503 = scalar_select %p502, %s25, 1
        %s504 = smul.addr %s503, 4
        %s505 = scalar_lea.vmem %s6, %s504
      $region68: #{glore_unit_forward.4} parent=59 // pred_fallthru
        _
      // Predicated region
      $region69: #{glore_unit_forward.4} parent=59 // pred_check
        %p506 = pneg %p226
      $region70: #{glore_unit_forward.4} parent=59 // pred_check_branch
        %508 = sbr.rel (%p506) target = $region72
      $region71: #{glore_unit_forward.4} parent=59 // pred_region
        %p509 = scmp.lt.s32.totalorder %s25, 1
        %s510 = scalar_select %p509, %s25, 1
        %s511 = smul.addr %s510, 4
        %s512 = scalar_lea.vmem %s7, %s511
      $region72: #{glore_unit_forward.4} parent=59 // pred_fallthru
        _
    $region60: #{glore_unit_forward.4} parent=5 // pred_fallthru
      _
  $region6: #{glore_unit_forward.4} parent=0 // loop_footer
    %s18 = sadd.s32 1, %s14
  $region7: #{glore_unit_forward.4} parent=0 // loop_footer_branch
    %13 = sbr.rel target = $region3
  $region8: #{glore_unit_forward.4} parent=0 // loop_exit
    _

</llo_original>
